<compile_context>
chip_gen: v6e
topology: v6e:2x2x1
jax: 0.10.0
libtpu: 0.0.40
codegen_flags: <defaults>
</compile_context>

<pallas_src>
import jax
import jax.numpy as jnp
from jax import lax
from jax.experimental import pallas as pl
from jax.experimental.pallas import tpu as pltpu


def _round_up(x, m):
    return (x + m - 1) // m * m


def _maybe_pad(x, shape, dtype=None):
    """Cast / zero-pad only when actually needed (avoids extra HBM passes)."""
    if dtype is not None and x.dtype != jnp.dtype(dtype):
        x = x.astype(dtype)
    if tuple(x.shape) != tuple(shape):
        x = jnp.pad(x, [(0, t - s) for s, t in zip(x.shape, shape)])
    return x


# ---------------------------------------------------------------------------
# Kernels
# ---------------------------------------------------------------------------
def _finalize_logits(ent_sum, inv_len, pooled, wf_cls, wf_e1, wf_e2, b_fused):
    """Folded head:
       logits = tanh(pooled)@Wf_cls + tanh(avg1)@Wf_e1 + tanh(avg2)@Wf_e2 + b.
    Runs once per batch tile, so the per-entity slices are negligible; the
    slices are kept (instead of a multi-contracting-dim dot_general) for
    robust Mosaic lowering."""
    avg = jnp.tanh(ent_sum * inv_len)                            # [TB, 2, H]
    h = jnp.dot(jnp.tanh(pooled.astype(jnp.float32)), wf_cls,
                preferred_element_type=jnp.float32)
    h += jnp.dot(avg[:, 0, :], wf_e1, preferred_element_type=jnp.float32)
    h += jnp.dot(avg[:, 1, :], wf_e2, preferred_element_type=jnp.float32)
    return h + b_fused


def span_head_kernel_1d(wm_ref, inv_len_ref, seq_ref, pooled_ref,
                        wf_cls_ref, wf_e1_ref, wf_e2_ref, b_fused_ref,
                        logits_ref):
    """Whole (padded) sequence resident per batch tile: single masked-sum
    contraction, no accumulator scratch, no init/finalize branching."""
    ent_sum = lax.dot_general(
        wm_ref[...], seq_ref[...],
        dimension_numbers=(((2,), (1,)), ((0,), (0,))),
        preferred_element_type=jnp.float32)                      # [TB, 2, H]
    logits_ref[...] = _finalize_logits(
        ent_sum, inv_len_ref[...], pooled_ref[...], wf_cls_ref[...],
        wf_e1_ref[...], wf_e2_ref[...], b_fused_ref[...])


def span_head_kernel_2d(wm_ref, inv_len_ref, seq_ref, pooled_ref,
                        wf_cls_ref, wf_e1_ref, wf_e2_ref, b_fused_ref,
                        logits_ref, acc_ref):
    """Sequence streamed over a pipelined reduction axis; f32 VMEM acc."""
    si = pl.program_id(1)

    @pl.when(si == 0)
    def _init():
        acc_ref[...] = jnp.zeros_like(acc_ref)

    acc_ref[...] += lax.dot_general(
        wm_ref[...], seq_ref[...],
        dimension_numbers=(((2,), (1,)), ((0,), (0,))),
        preferred_element_type=jnp.float32)                      # [TB, 2, H]

    @pl.when(si == pl.num_programs(1) - 1)
    def _finalize():
        logits_ref[...] = _finalize_logits(
            acc_ref[...], inv_len_ref[...], pooled_ref[...], wf_cls_ref[...],
            wf_e1_ref[...], wf_e2_ref[...], b_fused_ref[...])


# ---------------------------------------------------------------------------
# Generation-aware tile / VMEM planning
# ---------------------------------------------------------------------------
def _plan_tiles(B, S, H, L_pad, seq_itemsize, max_tile_s=None):
    # Physical VMEM drives the block budget (v7x: 64 MiB/TC, v5e/v6e: 128 MiB).
    try:
        phys = int(pltpu.get_tpu_info().vmem_capacity_bytes)
    except Exception:
        phys = 64 * 1024 * 1024            # unknown: assume the smallest (v7x)
    if phys > 64 * 1024 * 1024:            # v5e / v6e: 128 MiB physical VMEM
        block_budget = 72 * 1024 * 1024
        vmem_limit = 96 * 1024 * 1024
    else:                                  # v7x-class: 64 MiB per TensorCore
        block_budget = 40 * 1024 * 1024
        vmem_limit = 56 * 1024 * 1024

    # Batch tile: multiple of 8 sublanes, up to 32 rows; keep >=2 batch tiles
    # when the padded batch allows, so the "parallel" axis shards across the
    # two TensorCores on v7x (harmless on single-TC v5e/v6e).
    B_pad8 = _round_up(B, 8)
    tile_b = min(32, B_pad8)
    if B_pad8 // tile_b < 2 and B_pad8 >= 16:
        tile_b = max(8, (B_pad8 // 2) // 8 * 8)
    B_pad = _round_up(B, tile_b)

    def blocks_bytes(ts):
        seq_blk = tile_b * ts * H * seq_itemsize            # dominant stream
        wm_blk = tile_b * 2 * ts * seq_itemsize
        resident = 4 * (3 * H * L_pad                       # folded weights
                        + tile_b * (L_pad + 3 * H + 2)      # out/acc/pooled/len
                        + L_pad)                            # bias
        return 2 * (seq_blk + wm_blk) + resident            # double-buffered

    S_pad8 = _round_up(S, 8)
    full_ok = blocks_bytes(S_pad8) <= block_budget
    if max_tile_s is not None:
        full_ok = full_ok and S_pad8 <= max_tile_s
    if full_ok:
        tile_s = S_pad8                    # whole sequence -> 1-D grid
    else:
        # Large streaming blocks, multiples of 128 so both the seq (sublane)
        # and mask (lane) block dims stay aligned.
        cap = 512 if max_tile_s is None else min(
            512, max(128, (max_tile_s // 128) * 128))
        tile_s = cap
        while tile_s > 128 and blocks_bytes(tile_s) > block_budget:
            tile_s -= 128
    S_pad = _round_up(S, tile_s)
    return tile_b, tile_s, B_pad, S_pad, vmem_limit


# ---------------------------------------------------------------------------
# Wrapper
# ---------------------------------------------------------------------------
def span_classification_head(seq_out, pooled_out, e1_mask, e2_mask, params,
                             *, seq_dtype=None, max_tile_s=None):
    """Span-classification head (eval mode).

    seq_dtype: dtype used to stream seq_out / masks through the kernel.
      None (default) -> seq_out's native dtype: no wrapper-side cast pass over
      the dominant B*S*H tensor.  Pass jnp.bfloat16 only if the backbone
      already emits bf16 or the extra cast + quantization is acceptable.
    max_tile_s: optional cap on the sequence tile (tuning/testing knob that
      forces the streamed-reduction kernel).
    """
    B, S, H = seq_out.shape
    L = params["w_lab"].shape[-1]
    if seq_dtype is None:
        seq_dtype = seq_out.dtype

    # --- host-side algebraic fold of the three FC layers into the classifier.
    w_lab = params["w_lab"].astype(jnp.float32)                    # [3H, L]
    wf_cls = params["w_cls"].astype(jnp.float32) @ w_lab[0:H]
    wf_e1 = params["w_e1"].astype(jnp.float32) @ w_lab[H:2 * H]
    wf_e2 = params["w_e2"].astype(jnp.float32) @ w_lab[2 * H:3 * H]
    b_fused = (params["b_cls"].astype(jnp.float32) @ w_lab[0:H]
               + params["b_e1"].astype(jnp.float32) @ w_lab[H:2 * H]
               + params["b_e2"].astype(jnp.float32) @ w_lab[2 * H:3 * H]
               + params["b_lab"].astype(jnp.float32))              # [1, L]

    # --- host-side mask prep (tiny tensors): stacked binary masks and 1/len.
    wm = jnp.stack([e1_mask, e2_mask], axis=1).astype(seq_dtype)   # [B, 2, S]
    counts = jnp.stack(
        [jnp.sum((e1_mask != 0).astype(jnp.float32), axis=1),
         jnp.sum((e2_mask != 0).astype(jnp.float32), axis=1)],
        axis=1)                                                    # [B, 2]
    # Clamp: keeps padded batch rows (and genuinely empty spans, which would
    # NaN in the PyTorch reference) finite; empty spans contribute 0.
    inv_len = (1.0 / jnp.maximum(counts, 1.0))[:, :, None]         # [B, 2, 1]

    L_pad = _round_up(max(L, 128), 128)
    tile_b, tile_s, B_pad, S_pad, vmem_limit = _plan_tiles(
        B, S, H, L_pad, jnp.dtype(seq_dtype).itemsize, max_tile_s)

    seq_p = _maybe_pad(seq_out, (B_pad, S_pad, H), seq_dtype)
    pooled_p = _maybe_pad(pooled_out, (B_pad, H), jnp.float32)
    wm_p = _maybe_pad(wm, (B_pad, 2, S_pad))
    inv_len_p = _maybe_pad(inv_len, (B_pad, 2, 1), jnp.float32)
    wf_cls_p = _maybe_pad(wf_cls, (H, L_pad))
    wf_e1_p = _maybe_pad(wf_e1, (H, L_pad))
    wf_e2_p = _maybe_pad(wf_e2, (H, L_pad))
    b_fused_p = _maybe_pad(b_fused, (1, L_pad))

    if S_pad == tile_s:
        # 1-D grid over batch tiles: whole sequence per step, no accumulator.
        grid = (B_pad // tile_b,)
        in_specs = [
            pl.BlockSpec((tile_b, 2, tile_s), lambda bi: (bi, 0, 0)),   # wm
            pl.BlockSpec((tile_b, 2, 1), lambda bi: (bi, 0, 0)),        # 1/len
            pl.BlockSpec((tile_b, tile_s, H), lambda bi: (bi, 0, 0)),   # seq
            pl.BlockSpec((tile_b, H), lambda bi: (bi, 0)),              # pooled
            pl.BlockSpec((H, L_pad), lambda bi: (0, 0)),                # Wf_cls
            pl.BlockSpec((H, L_pad), lambda bi: (0, 0)),                # Wf_e1
            pl.BlockSpec((H, L_pad), lambda bi: (0, 0)),                # Wf_e2
            pl.BlockSpec((1, L_pad), lambda bi: (0, 0)),                # b_fused
        ]
        out_spec = pl.BlockSpec((tile_b, L_pad), lambda bi: (bi, 0))
        scratch = ()
        kernel = span_head_kernel_1d
        dim_sem = ("parallel",)
    else:
        # 2-D grid: batch "parallel", sequence "arbitrary" pipelined reduce.
        grid = (B_pad // tile_b, S_pad // tile_s)
        in_specs = [
            pl.BlockSpec((tile_b, 2, tile_s), lambda bi, si: (bi, 0, si)),
            pl.BlockSpec((tile_b, 2, 1), lambda bi, si: (bi, 0, 0)),
            pl.BlockSpec((tile_b, tile_s, H), lambda bi, si: (bi, si, 0)),
            pl.BlockSpec((tile_b, H), lambda bi, si: (bi, 0)),
            pl.BlockSpec((H, L_pad), lambda bi, si: (0, 0)),
            pl.BlockSpec((H, L_pad), lambda bi, si: (0, 0)),
            pl.BlockSpec((H, L_pad), lambda bi, si: (0, 0)),
            pl.BlockSpec((1, L_pad), lambda bi, si: (0, 0)),
        ]
        out_spec = pl.BlockSpec((tile_b, L_pad), lambda bi, si: (bi, 0))
        scratch = (pltpu.VMEM((tile_b, 2, H), jnp.float32),)
        kernel = span_head_kernel_2d
        dim_sem = ("parallel", "arbitrary")

    grid_spec = pltpu.PrefetchScalarGridSpec(
        num_scalar_prefetch=0, grid=grid, in_specs=in_specs,
        out_specs=out_spec, scratch_shapes=scratch)

    logits_pad = pl.pallas_call(
        kernel,
        out_shape=jax.ShapeDtypeStruct((B_pad, L_pad), jnp.float32),
        grid_spec=grid_spec,
        compiler_params=pltpu.CompilerParams(
            dimension_semantics=dim_sem,
            vmem_limit_bytes=vmem_limit),
    )(wm_p, inv_len_p, seq_p, pooled_p, wf_cls_p, wf_e1_p, wf_e2_p, b_fused_p)

    return logits_pad[:B, :L]


# ---------------------------------------------------------------------------
# Pure-JAX reference (mirrors the PyTorch forward, eval mode)
# ---------------------------------------------------------------------------
def reference_head(seq_out, pooled_out, e1_mask, e2_mask, params):
    def entity_avg(hidden, mask):
        m = mask[:, :, None].astype(jnp.float32)
        length = jnp.sum((m != 0).astype(jnp.float32), axis=1)
        return jnp.sum(hidden * m, axis=1) / length

    def fc(x, w, b, act=True):
        if act:
            x = jnp.tanh(x)
        return x @ w + b

    h1 = entity_avg(seq_out, e1_mask)
    h2 = entity_avg(seq_out, e2_mask)
    p = fc(pooled_out, params["w_cls"], params["b_cls"])
    h1 = fc(h1, params["w_e1"], params["b_e1"])
    h2 = fc(h2, params["w_e2"], params["b_e2"])
    concat = jnp.concatenate([p, h1, h2], axis=-1)
    return fc(concat, params["w_lab"], params["b_lab"], act=False)


if __name__ == "__main__":
    B, S, H, L = 2, 256, 32, 8   # batch, seq_len, hidden_size, num_labels

    key = jax.random.PRNGKey(0)
    ks = jax.random.split(key, 10)

    # Backbone outputs (synthetic).
    seq_out = jax.random.normal(ks[0], (B, S, H), dtype=jnp.float32)
    pooled_out = jax.random.normal(ks[1], (B, H), dtype=jnp.float32)

    # Entity masks: contiguous non-empty spans per batch element.
    e1_mask = jnp.zeros((B, S), dtype=jnp.int32)
    e1_mask = e1_mask.at[0, 1:4].set(1).at[1, 2:5].set(1)
    e2_mask = jnp.zeros((B, S), dtype=jnp.int32)
    e2_mask = e2_mask.at[0, 5:7].set(1).at[1, 6:8].set(1)

    # Deterministic parameters (weights stored as [in, out]; biases [1, out]).
    scale = 0.05
    params = {
        "w_cls": scale * jax.random.normal(ks[2], (H, H), dtype=jnp.float32),
        "b_cls": scale * jax.random.normal(ks[3], (1, H), dtype=jnp.float32),
        "w_e1":  scale * jax.random.normal(ks[4], (H, H), dtype=jnp.float32),
        "b_e1":  scale * jax.random.normal(ks[5], (1, H), dtype=jnp.float32),
        "w_e2":  scale * jax.random.normal(ks[6], (H, H), dtype=jnp.float32),
        "b_e2":  scale * jax.random.normal(ks[7], (1, H), dtype=jnp.float32),
        "w_lab": scale * jax.random.normal(ks[8], (3 * H, L), dtype=jnp.float32),
        "b_lab": scale * jax.random.normal(ks[9], (1, L), dtype=jnp.float32),
    }

    ref = reference_head(seq_out, pooled_out, e1_mask, e2_mask, params)

    # 1) Default path: native f32 ingest, whole-sequence 1-D kernel.
    logits = jax.block_until_ready(
        span_classification_head(seq_out, pooled_out, e1_mask, e2_mask, params))
    assert logits.shape == (B, L)
    assert jnp.allclose(logits, ref, atol=1e-4, rtol=1e-3), \
        "1-D kernel mismatch vs reference"

    # 2) Streamed sequence-reduction path (2-D grid, f32 VMEM accumulator).
    logits_tiled = jax.block_until_ready(
        span_classification_head(seq_out, pooled_out, e1_mask, e2_mask, params,
                                 max_tile_s=128))
    assert jnp.allclose(logits_tiled, ref, atol=1e-4, rtol=1e-3), \
        "2-D (tiled) kernel mismatch vs reference"

    # 3) Explicit bf16 ingest of seq_out / masks (documented accuracy
    #    tradeoff; only worthwhile when the backbone already emits bf16).
    logits_bf16 = jax.block_until_ready(
        span_classification_head(seq_out, pooled_out, e1_mask, e2_mask, params,
                                 seq_dtype=jnp.bfloat16))
    assert jnp.allclose(logits_bf16, ref, atol=1e-2, rtol=1e-1), \
        "bf16 kernel mismatch vs reference"

    print("KERNEL_OK")
</pallas_src>

<mosaic_0001>
module attributes {stable_mosaic.version = 11 : i64} {
  func.func @span_head_kernel_1d(%arg0: i32, %arg1: memref<8x2x256xf32, #tpu.memory_space<vmem>>, %arg2: memref<8x2x1xf32, #tpu.memory_space<vmem>>, %arg3: memref<8x256x32xf32, #tpu.memory_space<vmem>>, %arg4: memref<8x32xf32, #tpu.memory_space<vmem>>, %arg5: memref<32x128xf32, #tpu.memory_space<vmem>>, %arg6: memref<32x128xf32, #tpu.memory_space<vmem>>, %arg7: memref<32x128xf32, #tpu.memory_space<vmem>>, %arg8: memref<1x128xf32, #tpu.memory_space<vmem>>, %arg9: memref<8x128xf32, #tpu.memory_space<vmem>>) attributes {dimension_semantics = [#tpu.dimension_semantics<parallel>], iteration_bounds = array<i64: 1>, scalar_prefetch = 0 : i64, scratch_operands = 0 : i64, tpu.core_type = #tpu.core_type<tc>, window_params = [{transform_indices = @transform_0, window_bounds = array<i64: 8, 2, 256>}, {transform_indices = @transform_1, window_bounds = array<i64: 8, 2, 1>}, {transform_indices = @transform_2, window_bounds = array<i64: 8, 256, 32>}, {transform_indices = @transform_3, window_bounds = array<i64: 8, 32>}, {pipeline_mode = #tpu.pipeline_mode<synchronous>, transform_indices = @transform_4, window_bounds = array<i64: 32, 128>}, {pipeline_mode = #tpu.pipeline_mode<synchronous>, transform_indices = @transform_5, window_bounds = array<i64: 32, 128>}, {pipeline_mode = #tpu.pipeline_mode<synchronous>, transform_indices = @transform_6, window_bounds = array<i64: 32, 128>}, {pipeline_mode = #tpu.pipeline_mode<synchronous>, transform_indices = @transform_7, window_bounds = array<i64: 1, 128>}, {transform_indices = @transform_8, window_bounds = array<i64: 8, 128>}]} {
    %c0 = arith.constant 0 : index
    %c0_0 = arith.constant 0 : index
    %c0_1 = arith.constant 0 : index
    %0 = vector.load %arg1[%c0, %c0_0, %c0_1] : memref<8x2x256xf32, #tpu.memory_space<vmem>>, vector<8x2x256xf32>
    %c0_2 = arith.constant 0 : index
    %c0_3 = arith.constant 0 : index
    %c0_4 = arith.constant 0 : index
    %1 = vector.load %arg3[%c0_2, %c0_3, %c0_4] : memref<8x256x32xf32, #tpu.memory_space<vmem>>, vector<8x256x32xf32>
    %cst = arith.constant dense<0.000000e+00> : vector<8x2x32xf32>
    %2 = tpu.matmul %0, %1, %cst {dimension_numbers = #tpu.dot_dimension_numbers<[2], [1], [1], [2], [0, 0, 0, 1, 1, 2], [0], [0]>} : vector<8x2x256xf32>, vector<8x256x32xf32>, vector<8x2x32xf32> -> vector<8x2x32xf32>
    %c0_5 = arith.constant 0 : index
    %c0_6 = arith.constant 0 : index
    %c0_7 = arith.constant 0 : index
    %3 = vector.load %arg2[%c0_5, %c0_6, %c0_7] : memref<8x2x1xf32, #tpu.memory_space<vmem>>, vector<8x2x1xf32>
    %c0_8 = arith.constant 0 : index
    %c0_9 = arith.constant 0 : index
    %4 = vector.load %arg4[%c0_8, %c0_9] : memref<8x32xf32, #tpu.memory_space<vmem>>, vector<8x32xf32>
    %c0_10 = arith.constant 0 : index
    %c0_11 = arith.constant 0 : index
    %5 = vector.load %arg5[%c0_10, %c0_11] : memref<32x128xf32, #tpu.memory_space<vmem>>, vector<32x128xf32>
    %c0_12 = arith.constant 0 : index
    %c0_13 = arith.constant 0 : index
    %6 = vector.load %arg6[%c0_12, %c0_13] : memref<32x128xf32, #tpu.memory_space<vmem>>, vector<32x128xf32>
    %c0_14 = arith.constant 0 : index
    %c0_15 = arith.constant 0 : index
    %7 = vector.load %arg7[%c0_14, %c0_15] : memref<32x128xf32, #tpu.memory_space<vmem>>, vector<32x128xf32>
    %c0_16 = arith.constant 0 : index
    %c0_17 = arith.constant 0 : index
    %8 = vector.load %arg8[%c0_16, %c0_17] : memref<1x128xf32, #tpu.memory_space<vmem>>, vector<1x128xf32>
    %9 = vector.broadcast %3 : vector<8x2x1xf32> to vector<8x2x32xf32>
    %10 = arith.mulf %2, %9 : vector<8x2x32xf32>
    %11 = math.tanh %10 : vector<8x2x32xf32>
    %12 = math.tanh %4 : vector<8x32xf32>
    %cst_18 = arith.constant dense<0.000000e+00> : vector<8x128xf32>
    %13 = tpu.matmul %12, %5, %cst_18 {dimension_numbers = #tpu.dot_dimension_numbers<[1], [0], [0], [1], [0, 0, 1, 1], [], []>} : vector<8x32xf32>, vector<32x128xf32>, vector<8x128xf32> -> vector<8x128xf32>
    %14 = vector.extract_strided_slice %11 {offsets = [0, 0, 0], sizes = [8, 1, 32], strides = [1, 1, 1]} : vector<8x2x32xf32> to vector<8x1x32xf32>
    %15 = vector.shape_cast %14 : vector<8x1x32xf32> to vector<8x32xf32>
    %cst_19 = arith.constant dense<0.000000e+00> : vector<8x128xf32>
    %16 = tpu.matmul %15, %6, %cst_19 {dimension_numbers = #tpu.dot_dimension_numbers<[1], [0], [0], [1], [0, 0, 1, 1], [], []>} : vector<8x32xf32>, vector<32x128xf32>, vector<8x128xf32> -> vector<8x128xf32>
    %17 = arith.addf %13, %16 : vector<8x128xf32>
    %18 = vector.extract_strided_slice %11 {offsets = [0, 1, 0], sizes = [8, 1, 32], strides = [1, 1, 1]} : vector<8x2x32xf32> to vector<8x1x32xf32>
    %19 = vector.shape_cast %18 : vector<8x1x32xf32> to vector<8x32xf32>
    %cst_20 = arith.constant dense<0.000000e+00> : vector<8x128xf32>
    %20 = tpu.matmul %19, %7, %cst_20 {dimension_numbers = #tpu.dot_dimension_numbers<[1], [0], [0], [1], [0, 0, 1, 1], [], []>} : vector<8x32xf32>, vector<32x128xf32>, vector<8x128xf32> -> vector<8x128xf32>
    %21 = arith.addf %17, %20 : vector<8x128xf32>
    %22 = vector.broadcast %8 : vector<1x128xf32> to vector<8x128xf32>
    %23 = arith.addf %21, %22 : vector<8x128xf32>
    %c0_21 = arith.constant 0 : index
    %c0_22 = arith.constant 0 : index
    %24 = vector.load %arg9[%c0_21, %c0_22] : memref<8x128xf32, #tpu.memory_space<vmem>>, vector<8x128xf32>
    tpu.vector_store %arg9[%c0_21, %c0_22], %23 {strides = array<i32>} : memref<8x128xf32, #tpu.memory_space<vmem>>, vector<8x128xf32>,
    return
  }
  func.func @transform_0(%arg0: i32) -> (i32, i32, i32) {
    %c0_i32 = arith.constant 0 : i32
    %c0_i32_0 = arith.constant 0 : i32
    %c0_i32_1 = arith.constant 0 : i32
    return %arg0, %c0_i32, %c0_i32_0 : i32, i32, i32
  }
  func.func @transform_1(%arg0: i32) -> (i32, i32, i32) {
    %c0_i32 = arith.constant 0 : i32
    %c0_i32_0 = arith.constant 0 : i32
    %c0_i32_1 = arith.constant 0 : i32
    return %arg0, %c0_i32, %c0_i32_0 : i32, i32, i32
  }
  func.func @transform_2(%arg0: i32) -> (i32, i32, i32) {
    %c0_i32 = arith.constant 0 : i32
    %c0_i32_0 = arith.constant 0 : i32
    %c0_i32_1 = arith.constant 0 : i32
    return %arg0, %c0_i32, %c0_i32_0 : i32, i32, i32
  }
  func.func @transform_3(%arg0: i32) -> (i32, i32) {
    %c0_i32 = arith.constant 0 : i32
    %c0_i32_0 = arith.constant 0 : i32
    return %arg0, %c0_i32 : i32, i32
  }
  func.func @transform_4(%arg0: i32) -> (i32, i32) {
    %c0_i32 = arith.constant 0 : i32
    %c0_i32_0 = arith.constant 0 : i32
    %c0_i32_1 = arith.constant 0 : i32
    return %c0_i32, %c0_i32_0 : i32, i32
  }
  func.func @transform_5(%arg0: i32) -> (i32, i32) {
    %c0_i32 = arith.constant 0 : i32
    %c0_i32_0 = arith.constant 0 : i32
    %c0_i32_1 = arith.constant 0 : i32
    return %c0_i32, %c0_i32_0 : i32, i32
  }
  func.func @transform_6(%arg0: i32) -> (i32, i32) {
    %c0_i32 = arith.constant 0 : i32
    %c0_i32_0 = arith.constant 0 : i32
    %c0_i32_1 = arith.constant 0 : i32
    return %c0_i32, %c0_i32_0 : i32, i32
  }
  func.func @transform_7(%arg0: i32) -> (i32, i32) {
    %c0_i32 = arith.constant 0 : i32
    %c0_i32_0 = arith.constant 0 : i32
    %c0_i32_1 = arith.constant 0 : i32
    return %c0_i32, %c0_i32_0 : i32, i32
  }
  func.func @transform_8(%arg0: i32) -> (i32, i32) {
    %c0_i32 = arith.constant 0 : i32
    %c0_i32_0 = arith.constant 0 : i32
    return %arg0, %c0_i32 : i32, i32
  }
}

</mosaic_0001>

<llo_original>
// kernel: tpu_custom_call.1
$region0: #{tpu_custom_call.1}
  #allocation0 [shape = 'u32[]', space=smem, size = 0x4, offset = 0x4, fixed_abs, tag = 'smem constant byte address 0x4 - core index']
  #allocation1 [shape = 'u32[144,128]{1,0:T(1,128)}', space=vmem, size = 0x12000, scoped, tag = 'internal scratch']
  %s0 = inlined_call_operand.vmem [shape: f32[8,2,256], index: 0, kind: input, shape index: {}]
  %s1 = inlined_call_operand.vmem [shape: f32[8,2,1], index: 1, kind: input, shape index: {}]
  %s2 = inlined_call_operand.vmem [shape: f32[8,256,32], index: 2, kind: input, shape index: {}]
  %s3 = inlined_call_operand.vmem [shape: f32[8,32], index: 3, kind: input, shape index: {}]
  %s4 = inlined_call_operand.vmem [shape: f32[32,128], index: 4, kind: input, shape index: {}]
  %s5 = inlined_call_operand.vmem [shape: f32[32,128], index: 5, kind: input, shape index: {}]
  %s6 = inlined_call_operand.vmem [shape: f32[32,128], index: 6, kind: input, shape index: {}]
  %s7 = inlined_call_operand.vmem [shape: f32[1,128], index: 7, kind: input, shape index: {}]
  %s8 = inlined_call_operand.hbm [shape: f32[8,128], index: 8, kind: output, shape index: {}]
  %s9 = sld [smem:[#allocation0]]
  $region42: #{tpu_custom_call.1} parent=0
    _
  %s11 = ssub.s32 1, %s9
  %s12 = scalar_select 0, %s11, %s9
  $region1: #{tpu_custom_call.1} parent=0
    #allocation2 [shape = 'u8[4096]{0}', space=vmem, size = 0x1000, scoped, tag = 'output window, operand 0, single buffered']
    #allocation3 [shape = 's32[1]{0}', space=sflag, size = 0x4, scoped, tag = 'scoped memory for tpu_custom_call.1']
    %13 = vsyncpa [#allocation3], 0
    // Predicated region
    $region2: #{tpu_custom_call.1} parent=1 // pred_check
      _
    $region3: #{tpu_custom_call.1} parent=1 // pred_check_branch
      %15 = sbr.rel (0) target = $region5
    $region4: #{tpu_custom_call.1} parent=1 // pred_region
      _
    $region5: #{tpu_custom_call.1} parent=1 // pred_fallthru
      _
    // Predicated region
    $region6: #{tpu_custom_call.1} parent=1 // pred_check
      _
    $region7: #{tpu_custom_call.1} parent=1 // pred_check_branch
      %17 = sbr.rel (0) target = $region9
    $region8: #{tpu_custom_call.1} parent=1 // pred_region
      _
    $region9: #{tpu_custom_call.1} parent=1 // pred_fallthru
      _
    // Predicated region
    $region10: #{tpu_custom_call.1} parent=1 // pred_check
      _
    $region11: #{tpu_custom_call.1} parent=1 // pred_check_branch
      %19 = sbr.rel (0) target = $region13
    $region12: #{tpu_custom_call.1} parent=1 // pred_region
      _
    $region13: #{tpu_custom_call.1} parent=1 // pred_fallthru
      _
    // Predicated region
    $region14: #{tpu_custom_call.1} parent=1 // pred_check
      _
    $region15: #{tpu_custom_call.1} parent=1 // pred_check_branch
      %21 = sbr.rel (0) target = $region17
    $region16: #{tpu_custom_call.1} parent=1 // pred_region
      _
    $region17: #{tpu_custom_call.1} parent=1 // pred_fallthru
      _
    // Predicated region
    $region18: #{tpu_custom_call.1} parent=1 // pred_check
      _
    $region19: #{tpu_custom_call.1} parent=1 // pred_check_branch
      %23 = sbr.rel (0) target = $region21
    $region20: #{tpu_custom_call.1} parent=1 // pred_region
      _
    $region21: #{tpu_custom_call.1} parent=1 // pred_fallthru
      _
    // Predicated region
    $region22: #{tpu_custom_call.1} parent=1 // pred_check
      _
    $region23: #{tpu_custom_call.1} parent=1 // pred_check_branch
      %25 = sbr.rel (0) target = $region25
    $region24: #{tpu_custom_call.1} parent=1 // pred_region
      _
    $region25: #{tpu_custom_call.1} parent=1 // pred_fallthru
      _
    // Predicated region
    $region26: #{tpu_custom_call.1} parent=1 // pred_check
      _
    $region27: #{tpu_custom_call.1} parent=1 // pred_check_branch
      %27 = sbr.rel (0) target = $region29
    $region28: #{tpu_custom_call.1} parent=1 // pred_region
      _
    $region29: #{tpu_custom_call.1} parent=1 // pred_fallthru
      _
    // Predicated region
    $region30: #{tpu_custom_call.1} parent=1 // pred_check
      _
    $region31: #{tpu_custom_call.1} parent=1 // pred_check_branch
      %29 = sbr.rel (0) target = $region33
    $region32: #{tpu_custom_call.1} parent=1 // pred_region
      _
    $region33: #{tpu_custom_call.1} parent=1 // pred_fallthru
      _
    %v30 = vld [vmem:[%s0] sm:$0xf]
    %v31 = vld [vmem:[%s0 + $0x4] sm:$0xf]
    %v32 = vld [vmem:[%s0 + $0x8] sm:$0xf]
    %v33 = vld [vmem:[%s0 + $0xc] sm:$0xf]
    %v34 = vld [vmem:[%s0 + $0x10] sm:$0xf]
    %v35 = vld [vmem:[%s0 + $0x14] sm:$0xf]
    %v36 = vld [vmem:[%s0 + $0x18] sm:$0xf]
    %v37 = vld [vmem:[%s0 + $0x1c] sm:$0xf]
    %v38 = vld [vmem:[%s2] sm:$0xff]
    %v39 = vld [vmem:[%s2 + $0x8] sm:$0xff]
    %v40 = vld [vmem:[%s2 + $0x10] sm:$0xff]
    %v41 = vld [vmem:[%s2 + $0x18] sm:$0xff]
    %v42 = vld [vmem:[%s2 + $0x20] sm:$0xff]
    %v43 = vld [vmem:[%s2 + $0x28] sm:$0xff]
    %v44 = vld [vmem:[%s2 + $0x30] sm:$0xff]
    %v45 = vld [vmem:[%s2 + $0x38] sm:$0xff]
    %v46 = vld [vmem:[%s2 + $0x40] sm:$0xff]
    %v47 = vld [vmem:[%s2 + $0x48] sm:$0xff]
    %v48 = vld [vmem:[%s2 + $0x50] sm:$0xff]
    %v49 = vld [vmem:[%s2 + $0x58] sm:$0xff]
    %v50 = vld [vmem:[%s2 + $0x60] sm:$0xff]
    %v51 = vld [vmem:[%s2 + $0x68] sm:$0xff]
    %v52 = vld [vmem:[%s2 + $0x70] sm:$0xff]
    %v53 = vld [vmem:[%s2 + $0x78] sm:$0xff]
    %v54 = vld [vmem:[%s2 + $0x80] sm:$0xff]
    %v55 = vld [vmem:[%s2 + $0x88] sm:$0xff]
    %v56 = vld [vmem:[%s2 + $0x90] sm:$0xff]
    %v57 = vld [vmem:[%s2 + $0x98] sm:$0xff]
    %v58 = vld [vmem:[%s2 + $0xa0] sm:$0xff]
    %v59 = vld [vmem:[%s2 + $0xa8] sm:$0xff]
    %v60 = vld [vmem:[%s2 + $0xb0] sm:$0xff]
    %v61 = vld [vmem:[%s2 + $0xb8] sm:$0xff]
    %v62 = vld [vmem:[%s2 + $0xc0] sm:$0xff]
    %v63 = vld [vmem:[%s2 + $0xc8] sm:$0xff]
    %v64 = vld [vmem:[%s2 + $0xd0] sm:$0xff]
    %v65 = vld [vmem:[%s2 + $0xd8] sm:$0xff]
    %v66 = vld [vmem:[%s2 + $0xe0] sm:$0xff]
    %v67 = vld [vmem:[%s2 + $0xe8] sm:$0xff]
    %v68 = vld [vmem:[%s2 + $0xf0] sm:$0xff]
    %v69 = vld [vmem:[%s2 + $0xf8] sm:$0xff]
    %v70 = vld [vmem:[%s2 + $0x100] sm:$0xff]
    %v71 = vld [vmem:[%s2 + $0x108] sm:$0xff]
    %v72 = vld [vmem:[%s2 + $0x110] sm:$0xff]
    %v73 = vld [vmem:[%s2 + $0x118] sm:$0xff]
    %v74 = vld [vmem:[%s2 + $0x120] sm:$0xff]
    %v75 = vld [vmem:[%s2 + $0x128] sm:$0xff]
    %v76 = vld [vmem:[%s2 + $0x130] sm:$0xff]
    %v77 = vld [vmem:[%s2 + $0x138] sm:$0xff]
    %v78 = vld [vmem:[%s2 + $0x140] sm:$0xff]
    %v79 = vld [vmem:[%s2 + $0x148] sm:$0xff]
    %v80 = vld [vmem:[%s2 + $0x150] sm:$0xff]
    %v81 = vld [vmem:[%s2 + $0x158] sm:$0xff]
    %v82 = vld [vmem:[%s2 + $0x160] sm:$0xff]
    %v83 = vld [vmem:[%s2 + $0x168] sm:$0xff]
    %v84 = vld [vmem:[%s2 + $0x170] sm:$0xff]
    %v85 = vld [vmem:[%s2 + $0x178] sm:$0xff]
    %v86 = vld [vmem:[%s2 + $0x180] sm:$0xff]
    %v87 = vld [vmem:[%s2 + $0x188] sm:$0xff]
    %v88 = vld [vmem:[%s2 + $0x190] sm:$0xff]
    %v89 = vld [vmem:[%s2 + $0x198] sm:$0xff]
    %v90 = vld [vmem:[%s2 + $0x1a0] sm:$0xff]
    %v91 = vld [vmem:[%s2 + $0x1a8] sm:$0xff]
    %v92 = vld [vmem:[%s2 + $0x1b0] sm:$0xff]
    %v93 = vld [vmem:[%s2 + $0x1b8] sm:$0xff]
    %v94 = vld [vmem:[%s2 + $0x1c0] sm:$0xff]
    %v95 = vld [vmem:[%s2 + $0x1c8] sm:$0xff]
    %v96 = vld [vmem:[%s2 + $0x1d0] sm:$0xff]
    %v97 = vld [vmem:[%s2 + $0x1d8] sm:$0xff]
    %v98 = vld [vmem:[%s2 + $0x1e0] sm:$0xff]
    %v99 = vld [vmem:[%s2 + $0x1e8] sm:$0xff]
    %v100 = vld [vmem:[%s2 + $0x1f0] sm:$0xff]
    %v101 = vld [vmem:[%s2 + $0x1f8] sm:$0xff]
    %v102 = vld [vmem:[%s2 + $0x200] sm:$0xff]
    %v103 = vld [vmem:[%s2 + $0x208] sm:$0xff]
    %v104 = vld [vmem:[%s2 + $0x210] sm:$0xff]
    %v105 = vld [vmem:[%s2 + $0x218] sm:$0xff]
    %v106 = vld [vmem:[%s2 + $0x220] sm:$0xff]
    %v107 = vld [vmem:[%s2 + $0x228] sm:$0xff]
    %v108 = vld [vmem:[%s2 + $0x230] sm:$0xff]
    %v109 = vld [vmem:[%s2 + $0x238] sm:$0xff]
    %v110 = vld [vmem:[%s2 + $0x240] sm:$0xff]
    %v111 = vld [vmem:[%s2 + $0x248] sm:$0xff]
    %v112 = vld [vmem:[%s2 + $0x250] sm:$0xff]
    %v113 = vld [vmem:[%s2 + $0x258] sm:$0xff]
    %v114 = vld [vmem:[%s2 + $0x260] sm:$0xff]
    %v115 = vld [vmem:[%s2 + $0x268] sm:$0xff]
    %v116 = vld [vmem:[%s2 + $0x270] sm:$0xff]
    %v117 = vld [vmem:[%s2 + $0x278] sm:$0xff]
    %v118 = vld [vmem:[%s2 + $0x280] sm:$0xff]
    %v119 = vld [vmem:[%s2 + $0x288] sm:$0xff]
    %v120 = vld [vmem:[%s2 + $0x290] sm:$0xff]
    %v121 = vld [vmem:[%s2 + $0x298] sm:$0xff]
    %v122 = vld [vmem:[%s2 + $0x2a0] sm:$0xff]
    %v123 = vld [vmem:[%s2 + $0x2a8] sm:$0xff]
    %v124 = vld [vmem:[%s2 + $0x2b0] sm:$0xff]
    %v125 = vld [vmem:[%s2 + $0x2b8] sm:$0xff]
    %v126 = vld [vmem:[%s2 + $0x2c0] sm:$0xff]
    %v127 = vld [vmem:[%s2 + $0x2c8] sm:$0xff]
    %v128 = vld [vmem:[%s2 + $0x2d0] sm:$0xff]
    %v129 = vld [vmem:[%s2 + $0x2d8] sm:$0xff]
    %v130 = vld [vmem:[%s2 + $0x2e0] sm:$0xff]
    %v131 = vld [vmem:[%s2 + $0x2e8] sm:$0xff]
    %v132 = vld [vmem:[%s2 + $0x2f0] sm:$0xff]
    %v133 = vld [vmem:[%s2 + $0x2f8] sm:$0xff]
    %v134 = vld [vmem:[%s2 + $0x300] sm:$0xff]
    %v135 = vld [vmem:[%s2 + $0x308] sm:$0xff]
    %v136 = vld [vmem:[%s2 + $0x310] sm:$0xff]
    %v137 = vld [vmem:[%s2 + $0x318] sm:$0xff]
    %v138 = vld [vmem:[%s2 + $0x320] sm:$0xff]
    %v139 = vld [vmem:[%s2 + $0x328] sm:$0xff]
    %v140 = vld [vmem:[%s2 + $0x330] sm:$0xff]
    %v141 = vld [vmem:[%s2 + $0x338] sm:$0xff]
    %v142 = vld [vmem:[%s2 + $0x340] sm:$0xff]
    %v143 = vld [vmem:[%s2 + $0x348] sm:$0xff]
    %v144 = vld [vmem:[%s2 + $0x350] sm:$0xff]
    %v145 = vld [vmem:[%s2 + $0x358] sm:$0xff]
    %v146 = vld [vmem:[%s2 + $0x360] sm:$0xff]
    %v147 = vld [vmem:[%s2 + $0x368] sm:$0xff]
    %v148 = vld [vmem:[%s2 + $0x370] sm:$0xff]
    %v149 = vld [vmem:[%s2 + $0x378] sm:$0xff]
    %v150 = vld [vmem:[%s2 + $0x380] sm:$0xff]
    %v151 = vld [vmem:[%s2 + $0x388] sm:$0xff]
    %v152 = vld [vmem:[%s2 + $0x390] sm:$0xff]
    %v153 = vld [vmem:[%s2 + $0x398] sm:$0xff]
    %v154 = vld [vmem:[%s2 + $0x3a0] sm:$0xff]
    %v155 = vld [vmem:[%s2 + $0x3a8] sm:$0xff]
    %v156 = vld [vmem:[%s2 + $0x3b0] sm:$0xff]
    %v157 = vld [vmem:[%s2 + $0x3b8] sm:$0xff]
    %v158 = vld [vmem:[%s2 + $0x3c0] sm:$0xff]
    %v159 = vld [vmem:[%s2 + $0x3c8] sm:$0xff]
    %v160 = vld [vmem:[%s2 + $0x3d0] sm:$0xff]
    %v161 = vld [vmem:[%s2 + $0x3d8] sm:$0xff]
    %v162 = vld [vmem:[%s2 + $0x3e0] sm:$0xff]
    %v163 = vld [vmem:[%s2 + $0x3e8] sm:$0xff]
    %v164 = vld [vmem:[%s2 + $0x3f0] sm:$0xff]
    %v165 = vld [vmem:[%s2 + $0x3f8] sm:$0xff]
    %v166 = vld [vmem:[%s2 + $0x400] sm:$0xff]
    %v167 = vld [vmem:[%s2 + $0x408] sm:$0xff]
    %v168 = vld [vmem:[%s2 + $0x410] sm:$0xff]
    %v169 = vld [vmem:[%s2 + $0x418] sm:$0xff]
    %v170 = vld [vmem:[%s2 + $0x420] sm:$0xff]
    %v171 = vld [vmem:[%s2 + $0x428] sm:$0xff]
    %v172 = vld [vmem:[%s2 + $0x430] sm:$0xff]
    %v173 = vld [vmem:[%s2 + $0x438] sm:$0xff]
    %v174 = vld [vmem:[%s2 + $0x440] sm:$0xff]
    %v175 = vld [vmem:[%s2 + $0x448] sm:$0xff]
    %v176 = vld [vmem:[%s2 + $0x450] sm:$0xff]
    %v177 = vld [vmem:[%s2 + $0x458] sm:$0xff]
    %v178 = vld [vmem:[%s2 + $0x460] sm:$0xff]
    %v179 = vld [vmem:[%s2 + $0x468] sm:$0xff]
    %v180 = vld [vmem:[%s2 + $0x470] sm:$0xff]
    %v181 = vld [vmem:[%s2 + $0x478] sm:$0xff]
    %v182 = vld [vmem:[%s2 + $0x480] sm:$0xff]
    %v183 = vld [vmem:[%s2 + $0x488] sm:$0xff]
    %v184 = vld [vmem:[%s2 + $0x490] sm:$0xff]
    %v185 = vld [vmem:[%s2 + $0x498] sm:$0xff]
    %v186 = vld [vmem:[%s2 + $0x4a0] sm:$0xff]
    %v187 = vld [vmem:[%s2 + $0x4a8] sm:$0xff]
    %v188 = vld [vmem:[%s2 + $0x4b0] sm:$0xff]
    %v189 = vld [vmem:[%s2 + $0x4b8] sm:$0xff]
    %v190 = vld [vmem:[%s2 + $0x4c0] sm:$0xff]
    %v191 = vld [vmem:[%s2 + $0x4c8] sm:$0xff]
    %v192 = vld [vmem:[%s2 + $0x4d0] sm:$0xff]
    %v193 = vld [vmem:[%s2 + $0x4d8] sm:$0xff]
    %v194 = vld [vmem:[%s2 + $0x4e0] sm:$0xff]
    %v195 = vld [vmem:[%s2 + $0x4e8] sm:$0xff]
    %v196 = vld [vmem:[%s2 + $0x4f0] sm:$0xff]
    %v197 = vld [vmem:[%s2 + $0x4f8] sm:$0xff]
    %v198 = vld [vmem:[%s2 + $0x500] sm:$0xff]
    %v199 = vld [vmem:[%s2 + $0x508] sm:$0xff]
    %v200 = vld [vmem:[%s2 + $0x510] sm:$0xff]
    %v201 = vld [vmem:[%s2 + $0x518] sm:$0xff]
    %v202 = vld [vmem:[%s2 + $0x520] sm:$0xff]
    %v203 = vld [vmem:[%s2 + $0x528] sm:$0xff]
    %v204 = vld [vmem:[%s2 + $0x530] sm:$0xff]
    %v205 = vld [vmem:[%s2 + $0x538] sm:$0xff]
    %v206 = vld [vmem:[%s2 + $0x540] sm:$0xff]
    %v207 = vld [vmem:[%s2 + $0x548] sm:$0xff]
    %v208 = vld [vmem:[%s2 + $0x550] sm:$0xff]
    %v209 = vld [vmem:[%s2 + $0x558] sm:$0xff]
    %v210 = vld [vmem:[%s2 + $0x560] sm:$0xff]
    %v211 = vld [vmem:[%s2 + $0x568] sm:$0xff]
    %v212 = vld [vmem:[%s2 + $0x570] sm:$0xff]
    %v213 = vld [vmem:[%s2 + $0x578] sm:$0xff]
    %v214 = vld [vmem:[%s2 + $0x580] sm:$0xff]
    %v215 = vld [vmem:[%s2 + $0x588] sm:$0xff]
    %v216 = vld [vmem:[%s2 + $0x590] sm:$0xff]
    %v217 = vld [vmem:[%s2 + $0x598] sm:$0xff]
    %v218 = vld [vmem:[%s2 + $0x5a0] sm:$0xff]
    %v219 = vld [vmem:[%s2 + $0x5a8] sm:$0xff]
    %v220 = vld [vmem:[%s2 + $0x5b0] sm:$0xff]
    %v221 = vld [vmem:[%s2 + $0x5b8] sm:$0xff]
    %v222 = vld [vmem:[%s2 + $0x5c0] sm:$0xff]
    %v223 = vld [vmem:[%s2 + $0x5c8] sm:$0xff]
    %v224 = vld [vmem:[%s2 + $0x5d0] sm:$0xff]
    %v225 = vld [vmem:[%s2 + $0x5d8] sm:$0xff]
    %v226 = vld [vmem:[%s2 + $0x5e0] sm:$0xff]
    %v227 = vld [vmem:[%s2 + $0x5e8] sm:$0xff]
    %v228 = vld [vmem:[%s2 + $0x5f0] sm:$0xff]
    %v229 = vld [vmem:[%s2 + $0x5f8] sm:$0xff]
    %v230 = vld [vmem:[%s2 + $0x600] sm:$0xff]
    %v231 = vld [vmem:[%s2 + $0x608] sm:$0xff]
    %v232 = vld [vmem:[%s2 + $0x610] sm:$0xff]
    %v233 = vld [vmem:[%s2 + $0x618] sm:$0xff]
    %v234 = vld [vmem:[%s2 + $0x620] sm:$0xff]
    %v235 = vld [vmem:[%s2 + $0x628] sm:$0xff]
    %v236 = vld [vmem:[%s2 + $0x630] sm:$0xff]
    %v237 = vld [vmem:[%s2 + $0x638] sm:$0xff]
    %v238 = vld [vmem:[%s2 + $0x640] sm:$0xff]
    %v239 = vld [vmem:[%s2 + $0x648] sm:$0xff]
    %v240 = vld [vmem:[%s2 + $0x650] sm:$0xff]
    %v241 = vld [vmem:[%s2 + $0x658] sm:$0xff]
    %v242 = vld [vmem:[%s2 + $0x660] sm:$0xff]
    %v243 = vld [vmem:[%s2 + $0x668] sm:$0xff]
    %v244 = vld [vmem:[%s2 + $0x670] sm:$0xff]
    %v245 = vld [vmem:[%s2 + $0x678] sm:$0xff]
    %v246 = vld [vmem:[%s2 + $0x680] sm:$0xff]
    %v247 = vld [vmem:[%s2 + $0x688] sm:$0xff]
    %v248 = vld [vmem:[%s2 + $0x690] sm:$0xff]
    %v249 = vld [vmem:[%s2 + $0x698] sm:$0xff]
    %v250 = vld [vmem:[%s2 + $0x6a0] sm:$0xff]
    %v251 = vld [vmem:[%s2 + $0x6a8] sm:$0xff]
    %v252 = vld [vmem:[%s2 + $0x6b0] sm:$0xff]
    %v253 = vld [vmem:[%s2 + $0x6b8] sm:$0xff]
    %v254 = vld [vmem:[%s2 + $0x6c0] sm:$0xff]
    %v255 = vld [vmem:[%s2 + $0x6c8] sm:$0xff]
    %v256 = vld [vmem:[%s2 + $0x6d0] sm:$0xff]
    %v257 = vld [vmem:[%s2 + $0x6d8] sm:$0xff]
    %v258 = vld [vmem:[%s2 + $0x6e0] sm:$0xff]
    %v259 = vld [vmem:[%s2 + $0x6e8] sm:$0xff]
    %v260 = vld [vmem:[%s2 + $0x6f0] sm:$0xff]
    %v261 = vld [vmem:[%s2 + $0x6f8] sm:$0xff]
    %v262 = vld [vmem:[%s2 + $0x700] sm:$0xff]
    %v263 = vld [vmem:[%s2 + $0x708] sm:$0xff]
    %v264 = vld [vmem:[%s2 + $0x710] sm:$0xff]
    %v265 = vld [vmem:[%s2 + $0x718] sm:$0xff]
    %v266 = vld [vmem:[%s2 + $0x720] sm:$0xff]
    %v267 = vld [vmem:[%s2 + $0x728] sm:$0xff]
    %v268 = vld [vmem:[%s2 + $0x730] sm:$0xff]
    %v269 = vld [vmem:[%s2 + $0x738] sm:$0xff]
    %v270 = vld [vmem:[%s2 + $0x740] sm:$0xff]
    %v271 = vld [vmem:[%s2 + $0x748] sm:$0xff]
    %v272 = vld [vmem:[%s2 + $0x750] sm:$0xff]
    %v273 = vld [vmem:[%s2 + $0x758] sm:$0xff]
    %v274 = vld [vmem:[%s2 + $0x760] sm:$0xff]
    %v275 = vld [vmem:[%s2 + $0x768] sm:$0xff]
    %v276 = vld [vmem:[%s2 + $0x770] sm:$0xff]
    %v277 = vld [vmem:[%s2 + $0x778] sm:$0xff]
    %v278 = vld [vmem:[%s2 + $0x780] sm:$0xff]
    %v279 = vld [vmem:[%s2 + $0x788] sm:$0xff]
    %v280 = vld [vmem:[%s2 + $0x790] sm:$0xff]
    %v281 = vld [vmem:[%s2 + $0x798] sm:$0xff]
    %v282 = vld [vmem:[%s2 + $0x7a0] sm:$0xff]
    %v283 = vld [vmem:[%s2 + $0x7a8] sm:$0xff]
    %v284 = vld [vmem:[%s2 + $0x7b0] sm:$0xff]
    %v285 = vld [vmem:[%s2 + $0x7b8] sm:$0xff]
    %v286 = vld [vmem:[%s2 + $0x7c0] sm:$0xff]
    %v287 = vld [vmem:[%s2 + $0x7c8] sm:$0xff]
    %v288 = vld [vmem:[%s2 + $0x7d0] sm:$0xff]
    %v289 = vld [vmem:[%s2 + $0x7d8] sm:$0xff]
    %v290 = vld [vmem:[%s2 + $0x7e0] sm:$0xff]
    %v291 = vld [vmem:[%s2 + $0x7e8] sm:$0xff]
    %v292 = vld [vmem:[%s2 + $0x7f0] sm:$0xff]
    %v293 = vld [vmem:[%s2 + $0x7f8] sm:$0xff]
    %v296 = vunpack.c.l.s4 1983009808
    %v297 = vunpack.c.0.s8 %v296
    %v298 = vlaneseq
    %v299 = vshrl.u32 %v298, 7
    %v300 = vsub.s32 %v297, %v299
    %v301 = vrot.slane %v30, %v300
    %v302 = vcombine.high %v301, %v301
    %305 = vmatprep.subr.mxu0 0.0
    %306 = vmatpush1.msra.mxu0 %v53
    %307 = vmatprep.subr.mxu0 0.0
    %308 = vmatpush1.msra.mxu0 %v52
    %309 = vmatprep.subr.mxu0 0.0
    %310 = vmatpush1.msra.mxu0 %v51
    %311 = vmatprep.subr.mxu0 0.0
    %312 = vmatpush1.msra.mxu0 %v50
    %313 = vmatprep.subr.mxu0 0.0
    %314 = vmatpush1.msra.mxu0 %v49
    %315 = vmatprep.subr.mxu0 0.0
    %316 = vmatpush1.msra.mxu0 %v48
    %317 = vmatprep.subr.mxu0 0.0
    %318 = vmatpush1.msra.mxu0 %v47
    %319 = vmatprep.subr.mxu0 0.0
    %320 = vmatpush1.msra.mxu0 %v46
    %321 = vmatprep.subr.mxu0 0.0
    %322 = vmatpush1.msra.mxu0 %v45
    %323 = vmatprep.subr.mxu0 0.0
    %324 = vmatpush1.msra.mxu0 %v44
    %325 = vmatprep.subr.mxu0 0.0
    %326 = vmatpush1.msra.mxu0 %v43
    %327 = vmatprep.subr.mxu0 0.0
    %328 = vmatpush1.msra.mxu0 %v42
    %329 = vmatprep.subr.mxu0 0.0
    %330 = vmatpush1.msra.mxu0 %v41
    %331 = vmatprep.subr.mxu0 0.0
    %332 = vmatpush1.msra.mxu0 %v40
    %333 = vmatprep.subr.mxu0 0.0
    %334 = vmatpush1.msra.mxu0 %v39
    %335 = vmatprep.subr.mxu0 0.0
    %336 = vmatpush1.msra.mxu0 %v38
    %337 = vmatprep.subr.mxu0 0.0
    %338 = vmatpush2.msra.mxu0 %v69
    %339 = vmatprep.subr.mxu0 0.0
    %340 = vmatpush2.msra.mxu0 %v68
    %341 = vmatprep.subr.mxu0 0.0
    %342 = vmatpush2.msra.mxu0 %v67
    %343 = vmatprep.subr.mxu0 0.0
    %344 = vmatpush2.msra.mxu0 %v66
    %345 = vmatprep.subr.mxu0 0.0
    %346 = vmatpush2.msra.mxu0 %v65
    %347 = vmatprep.subr.mxu0 0.0
    %348 = vmatpush2.msra.mxu0 %v64
    %349 = vmatprep.subr.mxu0 0.0
    %350 = vmatpush2.msra.mxu0 %v63
    %351 = vmatprep.subr.mxu0 0.0
    %352 = vmatpush2.msra.mxu0 %v62
    %353 = vmatprep.subr.mxu0 0.0
    %354 = vmatpush2.msra.mxu0 %v61
    %355 = vmatprep.subr.mxu0 0.0
    %356 = vmatpush2.msra.mxu0 %v60
    %357 = vmatprep.subr.mxu0 0.0
    %358 = vmatpush2.msra.mxu0 %v59
    %359 = vmatprep.subr.mxu0 0.0
    %360 = vmatpush2.msra.mxu0 %v58
    %361 = vmatprep.subr.mxu0 0.0
    %362 = vmatpush2.msra.mxu0 %v57
    %363 = vmatprep.subr.mxu0 0.0
    %364 = vmatpush2.msra.mxu0 %v56
    %365 = vmatprep.subr.mxu0 0.0
    %366 = vmatpush2.msra.mxu0 %v55
    %367 = vmatprep.subr.mxu0 0.0
    %368 = vmatpush2.msra.mxu0 %v54
    %369 = vmatprep.mubr.f32.mxu0 %v302
    %370 = vmatmul.mubr.f32.gmra.mxu0 %v301
    %v371 = vpop.f32.mrf.mxu0
    %v372 = vadd.f32 0.0, %v371
    %v373 = vpop.f32.mrf.mxu0
    %374 = vdwg.mxu0
    %v377 = vunpack.c.l.s4 1983009808
    %v378 = vunpack.c.0.s8 %v377
    %v379 = vlaneseq
    %v380 = vshrl.u32 %v379, 7
    %v381 = vsub.s32 %v378, %v380
    %v382 = vrot.slane %v31, %v381
    %v383 = vcombine.high %v382, %v382
    %386 = vmatprep.subr.mxu0 0.0
    %387 = vmatpush1.msra.mxu0 %v85
    %388 = vmatprep.subr.mxu0 0.0
    %389 = vmatpush1.msra.mxu0 %v84
    %390 = vmatprep.subr.mxu0 0.0
    %391 = vmatpush1.msra.mxu0 %v83
    %392 = vmatprep.subr.mxu0 0.0
    %393 = vmatpush1.msra.mxu0 %v82
    %394 = vmatprep.subr.mxu0 0.0
    %395 = vmatpush1.msra.mxu0 %v81
    %396 = vmatprep.subr.mxu0 0.0
    %397 = vmatpush1.msra.mxu0 %v80
    %398 = vmatprep.subr.mxu0 0.0
    %399 = vmatpush1.msra.mxu0 %v79
    %400 = vmatprep.subr.mxu0 0.0
    %401 = vmatpush1.msra.mxu0 %v78
    %402 = vmatprep.subr.mxu0 0.0
    %403 = vmatpush1.msra.mxu0 %v77
    %404 = vmatprep.subr.mxu0 0.0
    %405 = vmatpush1.msra.mxu0 %v76
    %406 = vmatprep.subr.mxu0 0.0
    %407 = vmatpush1.msra.mxu0 %v75
    %408 = vmatprep.subr.mxu0 0.0
    %409 = vmatpush1.msra.mxu0 %v74
    %410 = vmatprep.subr.mxu0 0.0
    %411 = vmatpush1.msra.mxu0 %v73
    %412 = vmatprep.subr.mxu0 0.0
    %413 = vmatpush1.msra.mxu0 %v72
    %414 = vmatprep.subr.mxu0 0.0
    %415 = vmatpush1.msra.mxu0 %v71
    %416 = vmatprep.subr.mxu0 0.0
    %417 = vmatpush1.msra.mxu0 %v70
    %418 = vmatprep.subr.mxu0 0.0
    %419 = vmatpush2.msra.mxu0 %v101
    %420 = vmatprep.subr.mxu0 0.0
    %421 = vmatpush2.msra.mxu0 %v100
    %422 = vmatprep.subr.mxu0 0.0
    %423 = vmatpush2.msra.mxu0 %v99
    %424 = vmatprep.subr.mxu0 0.0
    %425 = vmatpush2.msra.mxu0 %v98
    %426 = vmatprep.subr.mxu0 0.0
    %427 = vmatpush2.msra.mxu0 %v97
    %428 = vmatprep.subr.mxu0 0.0
    %429 = vmatpush2.msra.mxu0 %v96
    %430 = vmatprep.subr.mxu0 0.0
    %431 = vmatpush2.msra.mxu0 %v95
    %432 = vmatprep.subr.mxu0 0.0
    %433 = vmatpush2.msra.mxu0 %v94
    %434 = vmatprep.subr.mxu0 0.0
    %435 = vmatpush2.msra.mxu0 %v93
    %436 = vmatprep.subr.mxu0 0.0
    %437 = vmatpush2.msra.mxu0 %v92
    %438 = vmatprep.subr.mxu0 0.0
    %439 = vmatpush2.msra.mxu0 %v91
    %440 = vmatprep.subr.mxu0 0.0
    %441 = vmatpush2.msra.mxu0 %v90
    %442 = vmatprep.subr.mxu0 0.0
    %443 = vmatpush2.msra.mxu0 %v89
    %444 = vmatprep.subr.mxu0 0.0
    %445 = vmatpush2.msra.mxu0 %v88
    %446 = vmatprep.subr.mxu0 0.0
    %447 = vmatpush2.msra.mxu0 %v87
    %448 = vmatprep.subr.mxu0 0.0
    %449 = vmatpush2.msra.mxu0 %v86
    %450 = vmatprep.mubr.f32.mxu0 %v383
    %451 = vmatmul.mubr.f32.gmra.mxu0 %v382
    %v452 = vpop.f32.mrf.mxu0
    %v453 = vadd.f32 0.0, %v452
    %v454 = vpop.f32.mrf.mxu0
    %455 = vdwg.mxu0
    %v458 = vunpack.c.l.s4 1983009808
    %v459 = vunpack.c.0.s8 %v458
    %v460 = vlaneseq
    %v461 = vshrl.u32 %v460, 7
    %v462 = vsub.s32 %v459, %v461
    %v463 = vrot.slane %v32, %v462
    %v464 = vcombine.high %v463, %v463
    %467 = vmatprep.subr.mxu0 0.0
    %468 = vmatpush1.msra.mxu0 %v117
    %469 = vmatprep.subr.mxu0 0.0
    %470 = vmatpush1.msra.mxu0 %v116
    %471 = vmatprep.subr.mxu0 0.0
    %472 = vmatpush1.msra.mxu0 %v115
    %473 = vmatprep.subr.mxu0 0.0
    %474 = vmatpush1.msra.mxu0 %v114
    %475 = vmatprep.subr.mxu0 0.0
    %476 = vmatpush1.msra.mxu0 %v113
    %477 = vmatprep.subr.mxu0 0.0
    %478 = vmatpush1.msra.mxu0 %v112
    %479 = vmatprep.subr.mxu0 0.0
    %480 = vmatpush1.msra.mxu0 %v111
    %481 = vmatprep.subr.mxu0 0.0
    %482 = vmatpush1.msra.mxu0 %v110
    %483 = vmatprep.subr.mxu0 0.0
    %484 = vmatpush1.msra.mxu0 %v109
    %485 = vmatprep.subr.mxu0 0.0
    %486 = vmatpush1.msra.mxu0 %v108
    %487 = vmatprep.subr.mxu0 0.0
    %488 = vmatpush1.msra.mxu0 %v107
    %489 = vmatprep.subr.mxu0 0.0
    %490 = vmatpush1.msra.mxu0 %v106
    %491 = vmatprep.subr.mxu0 0.0
    %492 = vmatpush1.msra.mxu0 %v105
    %493 = vmatprep.subr.mxu0 0.0
    %494 = vmatpush1.msra.mxu0 %v104
    %495 = vmatprep.subr.mxu0 0.0
    %496 = vmatpush1.msra.mxu0 %v103
    %497 = vmatprep.subr.mxu0 0.0
    %498 = vmatpush1.msra.mxu0 %v102
    %499 = vmatprep.subr.mxu0 0.0
    %500 = vmatpush2.msra.mxu0 %v133
    %501 = vmatprep.subr.mxu0 0.0
    %502 = vmatpush2.msra.mxu0 %v132
    %503 = vmatprep.subr.mxu0 0.0
    %504 = vmatpush2.msra.mxu0 %v131
    %505 = vmatprep.subr.mxu0 0.0
    %506 = vmatpush2.msra.mxu0 %v130
    %507 = vmatprep.subr.mxu0 0.0
    %508 = vmatpush2.msra.mxu0 %v129
    %509 = vmatprep.subr.mxu0 0.0
    %510 = vmatpush2.msra.mxu0 %v128
    %511 = vmatprep.subr.mxu0 0.0
    %512 = vmatpush2.msra.mxu0 %v127
    %513 = vmatprep.subr.mxu0 0.0
    %514 = vmatpush2.msra.mxu0 %v126
    %515 = vmatprep.subr.mxu0 0.0
    %516 = vmatpush2.msra.mxu0 %v125
    %517 = vmatprep.subr.mxu0 0.0
    %518 = vmatpush2.msra.mxu0 %v124
    %519 = vmatprep.subr.mxu0 0.0
    %520 = vmatpush2.msra.mxu0 %v123
    %521 = vmatprep.subr.mxu0 0.0
    %522 = vmatpush2.msra.mxu0 %v122
    %523 = vmatprep.subr.mxu0 0.0
    %524 = vmatpush2.msra.mxu0 %v121
    %525 = vmatprep.subr.mxu0 0.0
    %526 = vmatpush2.msra.mxu0 %v120
    %527 = vmatprep.subr.mxu0 0.0
    %528 = vmatpush2.msra.mxu0 %v119
    %529 = vmatprep.subr.mxu0 0.0
    %530 = vmatpush2.msra.mxu0 %v118
    %531 = vmatprep.mubr.f32.mxu0 %v464
    %532 = vmatmul.mubr.f32.gmra.mxu0 %v463
    %v533 = vpop.f32.mrf.mxu0
    %v534 = vadd.f32 0.0, %v533
    %v535 = vpop.f32.mrf.mxu0
    %536 = vdwg.mxu0
    %v539 = vunpack.c.l.s4 1983009808
    %v540 = vunpack.c.0.s8 %v539
    %v541 = vlaneseq
    %v542 = vshrl.u32 %v541, 7
    %v543 = vsub.s32 %v540, %v542
    %v544 = vrot.slane %v33, %v543
    %v545 = vcombine.high %v544, %v544
    %548 = vmatprep.subr.mxu0 0.0
    %549 = vmatpush1.msra.mxu0 %v149
    %550 = vmatprep.subr.mxu0 0.0
    %551 = vmatpush1.msra.mxu0 %v148
    %552 = vmatprep.subr.mxu0 0.0
    %553 = vmatpush1.msra.mxu0 %v147
    %554 = vmatprep.subr.mxu0 0.0
    %555 = vmatpush1.msra.mxu0 %v146
    %556 = vmatprep.subr.mxu0 0.0
    %557 = vmatpush1.msra.mxu0 %v145
    %558 = vmatprep.subr.mxu0 0.0
    %559 = vmatpush1.msra.mxu0 %v144
    %560 = vmatprep.subr.mxu0 0.0
    %561 = vmatpush1.msra.mxu0 %v143
    %562 = vmatprep.subr.mxu0 0.0
    %563 = vmatpush1.msra.mxu0 %v142
    %564 = vmatprep.subr.mxu0 0.0
    %565 = vmatpush1.msra.mxu0 %v141
    %566 = vmatprep.subr.mxu0 0.0
    %567 = vmatpush1.msra.mxu0 %v140
    %568 = vmatprep.subr.mxu0 0.0
    %569 = vmatpush1.msra.mxu0 %v139
    %570 = vmatprep.subr.mxu0 0.0
    %571 = vmatpush1.msra.mxu0 %v138
    %572 = vmatprep.subr.mxu0 0.0
    %573 = vmatpush1.msra.mxu0 %v137
    %574 = vmatprep.subr.mxu0 0.0
    %575 = vmatpush1.msra.mxu0 %v136
    %576 = vmatprep.subr.mxu0 0.0
    %577 = vmatpush1.msra.mxu0 %v135
    %578 = vmatprep.subr.mxu0 0.0
    %579 = vmatpush1.msra.mxu0 %v134
    %580 = vmatprep.subr.mxu0 0.0
    %581 = vmatpush2.msra.mxu0 %v165
    %582 = vmatprep.subr.mxu0 0.0
    %583 = vmatpush2.msra.mxu0 %v164
    %584 = vmatprep.subr.mxu0 0.0
    %585 = vmatpush2.msra.mxu0 %v163
    %586 = vmatprep.subr.mxu0 0.0
    %587 = vmatpush2.msra.mxu0 %v162
    %588 = vmatprep.subr.mxu0 0.0
    %589 = vmatpush2.msra.mxu0 %v161
    %590 = vmatprep.subr.mxu0 0.0
    %591 = vmatpush2.msra.mxu0 %v160
    %592 = vmatprep.subr.mxu0 0.0
    %593 = vmatpush2.msra.mxu0 %v159
    %594 = vmatprep.subr.mxu0 0.0
    %595 = vmatpush2.msra.mxu0 %v158
    %596 = vmatprep.subr.mxu0 0.0
    %597 = vmatpush2.msra.mxu0 %v157
    %598 = vmatprep.subr.mxu0 0.0
    %599 = vmatpush2.msra.mxu0 %v156
    %600 = vmatprep.subr.mxu0 0.0
    %601 = vmatpush2.msra.mxu0 %v155
    %602 = vmatprep.subr.mxu0 0.0
    %603 = vmatpush2.msra.mxu0 %v154
    %604 = vmatprep.subr.mxu0 0.0
    %605 = vmatpush2.msra.mxu0 %v153
    %606 = vmatprep.subr.mxu0 0.0
    %607 = vmatpush2.msra.mxu0 %v152
    %608 = vmatprep.subr.mxu0 0.0
    %609 = vmatpush2.msra.mxu0 %v151
    %610 = vmatprep.subr.mxu0 0.0
    %611 = vmatpush2.msra.mxu0 %v150
    %612 = vmatprep.mubr.f32.mxu0 %v545
    %613 = vmatmul.mubr.f32.gmra.mxu0 %v544
    %v614 = vpop.f32.mrf.mxu0
    %v615 = vadd.f32 0.0, %v614
    %v616 = vpop.f32.mrf.mxu0
    %617 = vdwg.mxu0
    %v620 = vunpack.c.l.s4 1983009808
    %v621 = vunpack.c.0.s8 %v620
    %v622 = vlaneseq
    %v623 = vshrl.u32 %v622, 7
    %v624 = vsub.s32 %v621, %v623
    %v625 = vrot.slane %v34, %v624
    %v626 = vcombine.high %v625, %v625
    %629 = vmatprep.subr.mxu0 0.0
    %630 = vmatpush1.msra.mxu0 %v181
    %631 = vmatprep.subr.mxu0 0.0
    %632 = vmatpush1.msra.mxu0 %v180
    %633 = vmatprep.subr.mxu0 0.0
    %634 = vmatpush1.msra.mxu0 %v179
    %635 = vmatprep.subr.mxu0 0.0
    %636 = vmatpush1.msra.mxu0 %v178
    %637 = vmatprep.subr.mxu0 0.0
    %638 = vmatpush1.msra.mxu0 %v177
    %639 = vmatprep.subr.mxu0 0.0
    %640 = vmatpush1.msra.mxu0 %v176
    %641 = vmatprep.subr.mxu0 0.0
    %642 = vmatpush1.msra.mxu0 %v175
    %643 = vmatprep.subr.mxu0 0.0
    %644 = vmatpush1.msra.mxu0 %v174
    %645 = vmatprep.subr.mxu0 0.0
    %646 = vmatpush1.msra.mxu0 %v173
    %647 = vmatprep.subr.mxu0 0.0
    %648 = vmatpush1.msra.mxu0 %v172
    %649 = vmatprep.subr.mxu0 0.0
    %650 = vmatpush1.msra.mxu0 %v171
    %651 = vmatprep.subr.mxu0 0.0
    %652 = vmatpush1.msra.mxu0 %v170
    %653 = vmatprep.subr.mxu0 0.0
    %654 = vmatpush1.msra.mxu0 %v169
    %655 = vmatprep.subr.mxu0 0.0
    %656 = vmatpush1.msra.mxu0 %v168
    %657 = vmatprep.subr.mxu0 0.0
    %658 = vmatpush1.msra.mxu0 %v167
    %659 = vmatprep.subr.mxu0 0.0
    %660 = vmatpush1.msra.mxu0 %v166
    %661 = vmatprep.subr.mxu0 0.0
    %662 = vmatpush2.msra.mxu0 %v197
    %663 = vmatprep.subr.mxu0 0.0
    %664 = vmatpush2.msra.mxu0 %v196
    %665 = vmatprep.subr.mxu0 0.0
    %666 = vmatpush2.msra.mxu0 %v195
    %667 = vmatprep.subr.mxu0 0.0
    %668 = vmatpush2.msra.mxu0 %v194
    %669 = vmatprep.subr.mxu0 0.0
    %670 = vmatpush2.msra.mxu0 %v193
    %671 = vmatprep.subr.mxu0 0.0
    %672 = vmatpush2.msra.mxu0 %v192
    %673 = vmatprep.subr.mxu0 0.0
    %674 = vmatpush2.msra.mxu0 %v191
    %675 = vmatprep.subr.mxu0 0.0
    %676 = vmatpush2.msra.mxu0 %v190
    %677 = vmatprep.subr.mxu0 0.0
    %678 = vmatpush2.msra.mxu0 %v189
    %679 = vmatprep.subr.mxu0 0.0
    %680 = vmatpush2.msra.mxu0 %v188
    %681 = vmatprep.subr.mxu0 0.0
    %682 = vmatpush2.msra.mxu0 %v187
    %683 = vmatprep.subr.mxu0 0.0
    %684 = vmatpush2.msra.mxu0 %v186
    %685 = vmatprep.subr.mxu0 0.0
    %686 = vmatpush2.msra.mxu0 %v185
    %687 = vmatprep.subr.mxu0 0.0
    %688 = vmatpush2.msra.mxu0 %v184
    %689 = vmatprep.subr.mxu0 0.0
    %690 = vmatpush2.msra.mxu0 %v183
    %691 = vmatprep.subr.mxu0 0.0
    %692 = vmatpush2.msra.mxu0 %v182
    %693 = vmatprep.mubr.f32.mxu0 %v626
    %694 = vmatmul.mubr.f32.gmra.mxu0 %v625
    %v695 = vpop.f32.mrf.mxu0
    %v696 = vadd.f32 0.0, %v695
    %v697 = vpop.f32.mrf.mxu0
    %698 = vdwg.mxu0
    %v701 = vunpack.c.l.s4 1983009808
    %v702 = vunpack.c.0.s8 %v701
    %v703 = vlaneseq
    %v704 = vshrl.u32 %v703, 7
    %v705 = vsub.s32 %v702, %v704
    %v706 = vrot.slane %v35, %v705
    %v707 = vcombine.high %v706, %v706
    %710 = vmatprep.subr.mxu0 0.0
    %711 = vmatpush1.msra.mxu0 %v213
    %712 = vmatprep.subr.mxu0 0.0
    %713 = vmatpush1.msra.mxu0 %v212
    %714 = vmatprep.subr.mxu0 0.0
    %715 = vmatpush1.msra.mxu0 %v211
    %716 = vmatprep.subr.mxu0 0.0
    %717 = vmatpush1.msra.mxu0 %v210
    %718 = vmatprep.subr.mxu0 0.0
    %719 = vmatpush1.msra.mxu0 %v209
    %720 = vmatprep.subr.mxu0 0.0
    %721 = vmatpush1.msra.mxu0 %v208
    %722 = vmatprep.subr.mxu0 0.0
    %723 = vmatpush1.msra.mxu0 %v207
    %724 = vmatprep.subr.mxu0 0.0
    %725 = vmatpush1.msra.mxu0 %v206
    %726 = vmatprep.subr.mxu0 0.0
    %727 = vmatpush1.msra.mxu0 %v205
    %728 = vmatprep.subr.mxu0 0.0
    %729 = vmatpush1.msra.mxu0 %v204
    %730 = vmatprep.subr.mxu0 0.0
    %731 = vmatpush1.msra.mxu0 %v203
    %732 = vmatprep.subr.mxu0 0.0
    %733 = vmatpush1.msra.mxu0 %v202
    %734 = vmatprep.subr.mxu0 0.0
    %735 = vmatpush1.msra.mxu0 %v201
    %736 = vmatprep.subr.mxu0 0.0
    %737 = vmatpush1.msra.mxu0 %v200
    %738 = vmatprep.subr.mxu0 0.0
    %739 = vmatpush1.msra.mxu0 %v199
    %740 = vmatprep.subr.mxu0 0.0
    %741 = vmatpush1.msra.mxu0 %v198
    %742 = vmatprep.subr.mxu0 0.0
    %743 = vmatpush2.msra.mxu0 %v229
    %744 = vmatprep.subr.mxu0 0.0
    %745 = vmatpush2.msra.mxu0 %v228
    %746 = vmatprep.subr.mxu0 0.0
    %747 = vmatpush2.msra.mxu0 %v227
    %748 = vmatprep.subr.mxu0 0.0
    %749 = vmatpush2.msra.mxu0 %v226
    %750 = vmatprep.subr.mxu0 0.0
    %751 = vmatpush2.msra.mxu0 %v225
    %752 = vmatprep.subr.mxu0 0.0
    %753 = vmatpush2.msra.mxu0 %v224
    %754 = vmatprep.subr.mxu0 0.0
    %755 = vmatpush2.msra.mxu0 %v223
    %756 = vmatprep.subr.mxu0 0.0
    %757 = vmatpush2.msra.mxu0 %v222
    %758 = vmatprep.subr.mxu0 0.0
    %759 = vmatpush2.msra.mxu0 %v221
    %760 = vmatprep.subr.mxu0 0.0
    %761 = vmatpush2.msra.mxu0 %v220
    %762 = vmatprep.subr.mxu0 0.0
    %763 = vmatpush2.msra.mxu0 %v219
    %764 = vmatprep.subr.mxu0 0.0
    %765 = vmatpush2.msra.mxu0 %v218
    %766 = vmatprep.subr.mxu0 0.0
    %767 = vmatpush2.msra.mxu0 %v217
    %768 = vmatprep.subr.mxu0 0.0
    %769 = vmatpush2.msra.mxu0 %v216
    %770 = vmatprep.subr.mxu0 0.0
    %771 = vmatpush2.msra.mxu0 %v215
    %772 = vmatprep.subr.mxu0 0.0
    %773 = vmatpush2.msra.mxu0 %v214
    %774 = vmatprep.mubr.f32.mxu0 %v707
    %775 = vmatmul.mubr.f32.gmra.mxu0 %v706
    %v776 = vpop.f32.mrf.mxu0
    %v777 = vadd.f32 0.0, %v776
    %v778 = vpop.f32.mrf.mxu0
    %779 = vdwg.mxu0
    %v782 = vunpack.c.l.s4 1983009808
    %v783 = vunpack.c.0.s8 %v782
    %v784 = vlaneseq
    %v785 = vshrl.u32 %v784, 7
    %v786 = vsub.s32 %v783, %v785
    %v787 = vrot.slane %v36, %v786
    %v788 = vcombine.high %v787, %v787
    %791 = vmatprep.subr.mxu0 0.0
    %792 = vmatpush1.msra.mxu0 %v245
    %793 = vmatprep.subr.mxu0 0.0
    %794 = vmatpush1.msra.mxu0 %v244
    %795 = vmatprep.subr.mxu0 0.0
    %796 = vmatpush1.msra.mxu0 %v243
    %797 = vmatprep.subr.mxu0 0.0
    %798 = vmatpush1.msra.mxu0 %v242
    %799 = vmatprep.subr.mxu0 0.0
    %800 = vmatpush1.msra.mxu0 %v241
    %801 = vmatprep.subr.mxu0 0.0
    %802 = vmatpush1.msra.mxu0 %v240
    %803 = vmatprep.subr.mxu0 0.0
    %804 = vmatpush1.msra.mxu0 %v239
    %805 = vmatprep.subr.mxu0 0.0
    %806 = vmatpush1.msra.mxu0 %v238
    %807 = vmatprep.subr.mxu0 0.0
    %808 = vmatpush1.msra.mxu0 %v237
    %809 = vmatprep.subr.mxu0 0.0
    %810 = vmatpush1.msra.mxu0 %v236
    %811 = vmatprep.subr.mxu0 0.0
    %812 = vmatpush1.msra.mxu0 %v235
    %813 = vmatprep.subr.mxu0 0.0
    %814 = vmatpush1.msra.mxu0 %v234
    %815 = vmatprep.subr.mxu0 0.0
    %816 = vmatpush1.msra.mxu0 %v233
    %817 = vmatprep.subr.mxu0 0.0
    %818 = vmatpush1.msra.mxu0 %v232
    %819 = vmatprep.subr.mxu0 0.0
    %820 = vmatpush1.msra.mxu0 %v231
    %821 = vmatprep.subr.mxu0 0.0
    %822 = vmatpush1.msra.mxu0 %v230
    %823 = vmatprep.subr.mxu0 0.0
    %824 = vmatpush2.msra.mxu0 %v261
    %825 = vmatprep.subr.mxu0 0.0
    %826 = vmatpush2.msra.mxu0 %v260
    %827 = vmatprep.subr.mxu0 0.0
    %828 = vmatpush2.msra.mxu0 %v259
    %829 = vmatprep.subr.mxu0 0.0
    %830 = vmatpush2.msra.mxu0 %v258
    %831 = vmatprep.subr.mxu0 0.0
    %832 = vmatpush2.msra.mxu0 %v257
    %833 = vmatprep.subr.mxu0 0.0
    %834 = vmatpush2.msra.mxu0 %v256
    %835 = vmatprep.subr.mxu0 0.0
    %836 = vmatpush2.msra.mxu0 %v255
    %837 = vmatprep.subr.mxu0 0.0
    %838 = vmatpush2.msra.mxu0 %v254
    %839 = vmatprep.subr.mxu0 0.0
    %840 = vmatpush2.msra.mxu0 %v253
    %841 = vmatprep.subr.mxu0 0.0
    %842 = vmatpush2.msra.mxu0 %v252
    %843 = vmatprep.subr.mxu0 0.0
    %844 = vmatpush2.msra.mxu0 %v251
    %845 = vmatprep.subr.mxu0 0.0
    %846 = vmatpush2.msra.mxu0 %v250
    %847 = vmatprep.subr.mxu0 0.0
    %848 = vmatpush2.msra.mxu0 %v249
    %849 = vmatprep.subr.mxu0 0.0
    %850 = vmatpush2.msra.mxu0 %v248
    %851 = vmatprep.subr.mxu0 0.0
    %852 = vmatpush2.msra.mxu0 %v247
    %853 = vmatprep.subr.mxu0 0.0
    %854 = vmatpush2.msra.mxu0 %v246
    %855 = vmatprep.mubr.f32.mxu0 %v788
    %856 = vmatmul.mubr.f32.gmra.mxu0 %v787
    %v857 = vpop.f32.mrf.mxu0
    %v858 = vadd.f32 0.0, %v857
    %v859 = vpop.f32.mrf.mxu0
    %860 = vdwg.mxu0
    %v863 = vunpack.c.l.s4 1983009808
    %v864 = vunpack.c.0.s8 %v863
    %v865 = vlaneseq
    %v866 = vshrl.u32 %v865, 7
    %v867 = vsub.s32 %v864, %v866
    %v868 = vrot.slane %v37, %v867
    %v869 = vcombine.high %v868, %v868
    %872 = vmatprep.subr.mxu0 0.0
    %873 = vmatpush1.msra.mxu0 %v277
    %874 = vmatprep.subr.mxu0 0.0
    %875 = vmatpush1.msra.mxu0 %v276
    %876 = vmatprep.subr.mxu0 0.0
    %877 = vmatpush1.msra.mxu0 %v275
    %878 = vmatprep.subr.mxu0 0.0
    %879 = vmatpush1.msra.mxu0 %v274
    %880 = vmatprep.subr.mxu0 0.0
    %881 = vmatpush1.msra.mxu0 %v273
    %882 = vmatprep.subr.mxu0 0.0
    %883 = vmatpush1.msra.mxu0 %v272
    %884 = vmatprep.subr.mxu0 0.0
    %885 = vmatpush1.msra.mxu0 %v271
    %886 = vmatprep.subr.mxu0 0.0
    %887 = vmatpush1.msra.mxu0 %v270
    %888 = vmatprep.subr.mxu0 0.0
    %889 = vmatpush1.msra.mxu0 %v269
    %890 = vmatprep.subr.mxu0 0.0
    %891 = vmatpush1.msra.mxu0 %v268
    %892 = vmatprep.subr.mxu0 0.0
    %893 = vmatpush1.msra.mxu0 %v267
    %894 = vmatprep.subr.mxu0 0.0
    %895 = vmatpush1.msra.mxu0 %v266
    %896 = vmatprep.subr.mxu0 0.0
    %897 = vmatpush1.msra.mxu0 %v265
    %898 = vmatprep.subr.mxu0 0.0
    %899 = vmatpush1.msra.mxu0 %v264
    %900 = vmatprep.subr.mxu0 0.0
    %901 = vmatpush1.msra.mxu0 %v263
    %902 = vmatprep.subr.mxu0 0.0
    %903 = vmatpush1.msra.mxu0 %v262
    %904 = vmatprep.subr.mxu0 0.0
    %905 = vmatpush2.msra.mxu0 %v293
    %906 = vmatprep.subr.mxu0 0.0
    %907 = vmatpush2.msra.mxu0 %v292
    %908 = vmatprep.subr.mxu0 0.0
    %909 = vmatpush2.msra.mxu0 %v291
    %910 = vmatprep.subr.mxu0 0.0
    %911 = vmatpush2.msra.mxu0 %v290
    %912 = vmatprep.subr.mxu0 0.0
    %913 = vmatpush2.msra.mxu0 %v289
    %914 = vmatprep.subr.mxu0 0.0
    %915 = vmatpush2.msra.mxu0 %v288
    %916 = vmatprep.subr.mxu0 0.0
    %917 = vmatpush2.msra.mxu0 %v287
    %918 = vmatprep.subr.mxu0 0.0
    %919 = vmatpush2.msra.mxu0 %v286
    %920 = vmatprep.subr.mxu0 0.0
    %921 = vmatpush2.msra.mxu0 %v285
    %922 = vmatprep.subr.mxu0 0.0
    %923 = vmatpush2.msra.mxu0 %v284
    %924 = vmatprep.subr.mxu0 0.0
    %925 = vmatpush2.msra.mxu0 %v283
    %926 = vmatprep.subr.mxu0 0.0
    %927 = vmatpush2.msra.mxu0 %v282
    %928 = vmatprep.subr.mxu0 0.0
    %929 = vmatpush2.msra.mxu0 %v281
    %930 = vmatprep.subr.mxu0 0.0
    %931 = vmatpush2.msra.mxu0 %v280
    %932 = vmatprep.subr.mxu0 0.0
    %933 = vmatpush2.msra.mxu0 %v279
    %934 = vmatprep.subr.mxu0 0.0
    %935 = vmatpush2.msra.mxu0 %v278
    %936 = vmatprep.mubr.f32.mxu0 %v869
    %937 = vmatmul.mubr.f32.gmra.mxu0 %v868
    %v938 = vpop.f32.mrf.mxu0
    %v939 = vadd.f32 0.0, %v938
    %v940 = vpop.f32.mrf.mxu0
    %941 = vdwg.mxu0
    %v942 = vld [vmem:[%s1] sm:$0x3]
    %v943 = vld [vmem:[%s1 + $0x2] sm:$0x3]
    %v944 = vld [vmem:[%s1 + $0x4] sm:$0x3]
    %v945 = vld [vmem:[%s1 + $0x6] sm:$0x3]
    %v946 = vld [vmem:[%s1 + $0x8] sm:$0x3]
    %v947 = vld [vmem:[%s1 + $0xa] sm:$0x3]
    %v948 = vld [vmem:[%s1 + $0xc] sm:$0x3]
    %v949 = vld [vmem:[%s1 + $0xe] sm:$0x3]
    %v950 = vld [vmem:[%s3] sm:$0xff]
    %v951 = vld [vmem:[%s4] sm:$0xff]
    %v952 = vld [vmem:[%s4 + $0x8] sm:$0xff]
    %v953 = vld [vmem:[%s4 + $0x10] sm:$0xff]
    %v954 = vld [vmem:[%s4 + $0x18] sm:$0xff]
    %v955 = vld [vmem:[%s5] sm:$0xff]
    %v956 = vld [vmem:[%s5 + $0x8] sm:$0xff]
    %v957 = vld [vmem:[%s5 + $0x10] sm:$0xff]
    %v958 = vld [vmem:[%s5 + $0x18] sm:$0xff]
    %v959 = vld [vmem:[%s6] sm:$0xff]
    %v960 = vld [vmem:[%s6 + $0x8] sm:$0xff]
    %v961 = vld [vmem:[%s6 + $0x10] sm:$0xff]
    %v962 = vld [vmem:[%s6 + $0x18] sm:$0xff]
    %v963 = vld [vmem:[%s7] sm:$0x1]
    %965 = vset.pattern.permute.xlu0 0
    %966 = vperm.xlu0 %965, %v942
    %v967 = vpop.permute.xlu0 %966
    %970 = vset.pattern.permute.xlu0 0
    %971 = vperm.xlu0 %970, %v943
    %v972 = vpop.permute.xlu0 %971
    %975 = vset.pattern.permute.xlu0 0
    %976 = vperm.xlu0 %975, %v944
    %v977 = vpop.permute.xlu0 %976
    %980 = vset.pattern.permute.xlu0 0
    %981 = vperm.xlu0 %980, %v945
    %v982 = vpop.permute.xlu0 %981
    %985 = vset.pattern.permute.xlu0 0
    %986 = vperm.xlu0 %985, %v946
    %v987 = vpop.permute.xlu0 %986
    %990 = vset.pattern.permute.xlu0 0
    %991 = vperm.xlu0 %990, %v947
    %v992 = vpop.permute.xlu0 %991
    %995 = vset.pattern.permute.xlu0 0
    %996 = vperm.xlu0 %995, %v948
    %v997 = vpop.permute.xlu0 %996
    %1000 = vset.pattern.permute.xlu0 0
    %1001 = vperm.xlu0 %1000, %v949
    %v1002 = vpop.permute.xlu0 %1001
    %v1004 = vmul.f32 %v372, %v967
    %v1005 = vmul.f32 %v453, %v972
    %v1006 = vmul.f32 %v534, %v977
    %v1007 = vmul.f32 %v615, %v982
    %v1008 = vmul.f32 %v696, %v987
    %v1009 = vmul.f32 %v777, %v992
    %v1010 = vmul.f32 %v858, %v997
    %v1011 = vmul.f32 %v939, %v1002
    %v1012 = vtanh.pop %v1004
    %v1013 = vtanh.pop %v1005
    %v1014 = vtanh.pop %v1006
    %v1015 = vtanh.pop %v1007
    %v1016 = vtanh.pop %v1008
    %v1017 = vtanh.pop %v1009
    %v1018 = vtanh.pop %v1010
    %v1019 = vtanh.pop %v1011
    %v1020 = vtanh.pop %v950
    %v1029 = vrot.slane %v1013, 7
    %vm1030 = vcmask 1041409
    %v1031 = vsel %vm1030, %v1029, %v1012
    %v1032 = vrot.slane %v1014, 6
    %vm1033 = vcmask 1042434
    %v1034 = vsel %vm1033, %v1032, %v1031
    %v1035 = vrot.slane %v1015, 5
    %vm1036 = vcmask 1043459
    %v1037 = vsel %vm1036, %v1035, %v1034
    %v1038 = vrot.slane %v1016, 4
    %vm1039 = vcmask 1044484
    %v1040 = vsel %vm1039, %v1038, %v1037
    %v1041 = vrot.slane %v1017, 3
    %vm1042 = vcmask 1045509
    %v1043 = vsel %vm1042, %v1041, %v1040
    %v1044 = vrot.slane %v1018, 2
    %vm1045 = vcmask 1046534
    %v1046 = vsel %vm1045, %v1044, %v1043
    %v1047 = vrot.slane %v1019, 1
    %vm1048 = vcmask 1047559
    %v1049 = vsel %vm1048, %v1047, %v1046
    %vm1050 = vcmask 261120
    %v1051 = vsel %vm1050, %v1049, 0
    %1053 = vmatprep.subr.mxu0 0.0
    %1054 = vmatpush1.msra.mxu0 0.0
    %1055 = vmatprep.subr.mxu0 0.0
    %1056 = vmatpush1.msra.mxu0 0.0
    %1057 = vmatprep.subr.mxu0 0.0
    %1058 = vmatpush1.msra.mxu0 0.0
    %1059 = vmatprep.subr.mxu0 0.0
    %1060 = vmatpush1.msra.mxu0 0.0
    %1061 = vmatprep.subr.mxu0 0.0
    %1062 = vmatpush1.msra.mxu0 0.0
    %1063 = vmatprep.subr.mxu0 0.0
    %1064 = vmatpush1.msra.mxu0 0.0
    %1065 = vmatprep.subr.mxu0 0.0
    %1066 = vmatpush1.msra.mxu0 0.0
    %1067 = vmatprep.subr.mxu0 0.0
    %1068 = vmatpush1.msra.mxu0 0.0
    %1069 = vmatprep.subr.mxu0 0.0
    %1070 = vmatpush1.msra.mxu0 0.0
    %1071 = vmatprep.subr.mxu0 0.0
    %1072 = vmatpush1.msra.mxu0 0.0
    %1073 = vmatprep.subr.mxu0 0.0
    %1074 = vmatpush1.msra.mxu0 0.0
    %1075 = vmatprep.subr.mxu0 0.0
    %1076 = vmatpush1.msra.mxu0 0.0
    %1077 = vmatprep.subr.mxu0 0.0
    %1078 = vmatpush1.msra.mxu0 %v958
    %1079 = vmatprep.subr.mxu0 0.0
    %1080 = vmatpush1.msra.mxu0 %v957
    %1081 = vmatprep.subr.mxu0 0.0
    %1082 = vmatpush1.msra.mxu0 %v956
    %1083 = vmatprep.subr.mxu0 0.0
    %1084 = vmatpush1.msra.mxu0 %v955
    %1085 = vmatprep.subr.mxu0 0.0
    %1086 = vmatpush2.msra.mxu0 0.0
    %1087 = vmatprep.subr.mxu0 0.0
    %1088 = vmatpush2.msra.mxu0 0.0
    %1089 = vmatprep.subr.mxu0 0.0
    %1090 = vmatpush2.msra.mxu0 0.0
    %1091 = vmatprep.subr.mxu0 0.0
    %1092 = vmatpush2.msra.mxu0 0.0
    %1093 = vmatprep.subr.mxu0 0.0
    %1094 = vmatpush2.msra.mxu0 0.0
    %1095 = vmatprep.subr.mxu0 0.0
    %1096 = vmatpush2.msra.mxu0 0.0
    %1097 = vmatprep.subr.mxu0 0.0
    %1098 = vmatpush2.msra.mxu0 0.0
    %1099 = vmatprep.subr.mxu0 0.0
    %1100 = vmatpush2.msra.mxu0 0.0
    %1101 = vmatprep.subr.mxu0 0.0
    %1102 = vmatpush2.msra.mxu0 0.0
    %1103 = vmatprep.subr.mxu0 0.0
    %1104 = vmatpush2.msra.mxu0 0.0
    %1105 = vmatprep.subr.mxu0 0.0
    %1106 = vmatpush2.msra.mxu0 0.0
    %1107 = vmatprep.subr.mxu0 0.0
    %1108 = vmatpush2.msra.mxu0 0.0
    %1109 = vmatprep.subr.mxu0 0.0
    %1110 = vmatpush2.msra.mxu0 0.0
    %1111 = vmatprep.subr.mxu0 0.0
    %1112 = vmatpush2.msra.mxu0 0.0
    %1113 = vmatprep.subr.mxu0 0.0
    %1114 = vmatpush2.msra.mxu0 0.0
    %1115 = vmatprep.subr.mxu0 0.0
    %1116 = vmatpush2.msra.mxu0 0.0
    %1117 = vmatprep.mubr.f32.mxu0 0.0
    %1118 = vmatmul.mubr.f32.gmra.mxu0 %v1051
    %v1119 = vpop.f32.mrf.mxu0
    %v1120 = vadd.f32 0.0, %v1119
    %v1121 = vpop.f32.mrf.mxu0
    %1122 = vdwg.mxu0
    %v1124 = vsel %vm1050, %v1020, 0
    %1126 = vmatprep.subr.mxu0 0.0
    %1127 = vmatpush1.msra.mxu0 0.0
    %1128 = vmatprep.subr.mxu0 0.0
    %1129 = vmatpush1.msra.mxu0 0.0
    %1130 = vmatprep.subr.mxu0 0.0
    %1131 = vmatpush1.msra.mxu0 0.0
    %1132 = vmatprep.subr.mxu0 0.0
    %1133 = vmatpush1.msra.mxu0 0.0
    %1134 = vmatprep.subr.mxu0 0.0
    %1135 = vmatpush1.msra.mxu0 0.0
    %1136 = vmatprep.subr.mxu0 0.0
    %1137 = vmatpush1.msra.mxu0 0.0
    %1138 = vmatprep.subr.mxu0 0.0
    %1139 = vmatpush1.msra.mxu0 0.0
    %1140 = vmatprep.subr.mxu0 0.0
    %1141 = vmatpush1.msra.mxu0 0.0
    %1142 = vmatprep.subr.mxu0 0.0
    %1143 = vmatpush1.msra.mxu0 0.0
    %1144 = vmatprep.subr.mxu0 0.0
    %1145 = vmatpush1.msra.mxu0 0.0
    %1146 = vmatprep.subr.mxu0 0.0
    %1147 = vmatpush1.msra.mxu0 0.0
    %1148 = vmatprep.subr.mxu0 0.0
    %1149 = vmatpush1.msra.mxu0 0.0
    %1150 = vmatprep.subr.mxu0 0.0
    %1151 = vmatpush1.msra.mxu0 %v954
    %1152 = vmatprep.subr.mxu0 0.0
    %1153 = vmatpush1.msra.mxu0 %v953
    %1154 = vmatprep.subr.mxu0 0.0
    %1155 = vmatpush1.msra.mxu0 %v952
    %1156 = vmatprep.subr.mxu0 0.0
    %1157 = vmatpush1.msra.mxu0 %v951
    %1158 = vmatprep.subr.mxu0 0.0
    %1159 = vmatpush2.msra.mxu0 0.0
    %1160 = vmatprep.subr.mxu0 0.0
    %1161 = vmatpush2.msra.mxu0 0.0
    %1162 = vmatprep.subr.mxu0 0.0
    %1163 = vmatpush2.msra.mxu0 0.0
    %1164 = vmatprep.subr.mxu0 0.0
    %1165 = vmatpush2.msra.mxu0 0.0
    %1166 = vmatprep.subr.mxu0 0.0
    %1167 = vmatpush2.msra.mxu0 0.0
    %1168 = vmatprep.subr.mxu0 0.0
    %1169 = vmatpush2.msra.mxu0 0.0
    %1170 = vmatprep.subr.mxu0 0.0
    %1171 = vmatpush2.msra.mxu0 0.0
    %1172 = vmatprep.subr.mxu0 0.0
    %1173 = vmatpush2.msra.mxu0 0.0
    %1174 = vmatprep.subr.mxu0 0.0
    %1175 = vmatpush2.msra.mxu0 0.0
    %1176 = vmatprep.subr.mxu0 0.0
    %1177 = vmatpush2.msra.mxu0 0.0
    %1178 = vmatprep.subr.mxu0 0.0
    %1179 = vmatpush2.msra.mxu0 0.0
    %1180 = vmatprep.subr.mxu0 0.0
    %1181 = vmatpush2.msra.mxu0 0.0
    %1182 = vmatprep.subr.mxu0 0.0
    %1183 = vmatpush2.msra.mxu0 0.0
    %1184 = vmatprep.subr.mxu0 0.0
    %1185 = vmatpush2.msra.mxu0 0.0
    %1186 = vmatprep.subr.mxu0 0.0
    %1187 = vmatpush2.msra.mxu0 0.0
    %1188 = vmatprep.subr.mxu0 0.0
    %1189 = vmatpush2.msra.mxu0 0.0
    %1190 = vmatprep.mubr.f32.mxu0 0.0
    %1191 = vmatmul.mubr.f32.gmra.mxu0 %v1124
    %v1192 = vpop.f32.mrf.mxu0
    %v1193 = vadd.f32 %v1120, %v1192
    %v1194 = vpop.f32.mrf.mxu0
    %1195 = vdwg.mxu0
    %v1196 = vrot.slane %v1012, 1
    %v1197 = vsel %vm1030, %v1013, %v1196
    %v1198 = vrot.slane %v1014, 7
    %v1199 = vsel %vm1033, %v1198, %v1197
    %v1200 = vrot.slane %v1015, 6
    %v1201 = vsel %vm1036, %v1200, %v1199
    %v1202 = vrot.slane %v1016, 5
    %v1203 = vsel %vm1039, %v1202, %v1201
    %v1204 = vrot.slane %v1017, 4
    %v1205 = vsel %vm1042, %v1204, %v1203
    %v1206 = vrot.slane %v1018, 3
    %v1207 = vsel %vm1045, %v1206, %v1205
    %v1208 = vrot.slane %v1019, 2
    %v1209 = vsel %vm1048, %v1208, %v1207
    %v1210 = vsel %vm1050, %v1209, 0
    %1212 = vmatprep.subr.mxu0 0.0
    %1213 = vmatpush1.msra.mxu0 0.0
    %1214 = vmatprep.subr.mxu0 0.0
    %1215 = vmatpush1.msra.mxu0 0.0
    %1216 = vmatprep.subr.mxu0 0.0
    %1217 = vmatpush1.msra.mxu0 0.0
    %1218 = vmatprep.subr.mxu0 0.0
    %1219 = vmatpush1.msra.mxu0 0.0
    %1220 = vmatprep.subr.mxu0 0.0
    %1221 = vmatpush1.msra.mxu0 0.0
    %1222 = vmatprep.subr.mxu0 0.0
    %1223 = vmatpush1.msra.mxu0 0.0
    %1224 = vmatprep.subr.mxu0 0.0
    %1225 = vmatpush1.msra.mxu0 0.0
    %1226 = vmatprep.subr.mxu0 0.0
    %1227 = vmatpush1.msra.mxu0 0.0
    %1228 = vmatprep.subr.mxu0 0.0
    %1229 = vmatpush1.msra.mxu0 0.0
    %1230 = vmatprep.subr.mxu0 0.0
    %1231 = vmatpush1.msra.mxu0 0.0
    %1232 = vmatprep.subr.mxu0 0.0
    %1233 = vmatpush1.msra.mxu0 0.0
    %1234 = vmatprep.subr.mxu0 0.0
    %1235 = vmatpush1.msra.mxu0 0.0
    %1236 = vmatprep.subr.mxu0 0.0
    %1237 = vmatpush1.msra.mxu0 %v962
    %1238 = vmatprep.subr.mxu0 0.0
    %1239 = vmatpush1.msra.mxu0 %v961
    %1240 = vmatprep.subr.mxu0 0.0
    %1241 = vmatpush1.msra.mxu0 %v960
    %1242 = vmatprep.subr.mxu0 0.0
    %1243 = vmatpush1.msra.mxu0 %v959
    %1244 = vmatprep.subr.mxu0 0.0
    %1245 = vmatpush2.msra.mxu0 0.0
    %1246 = vmatprep.subr.mxu0 0.0
    %1247 = vmatpush2.msra.mxu0 0.0
    %1248 = vmatprep.subr.mxu0 0.0
    %1249 = vmatpush2.msra.mxu0 0.0
    %1250 = vmatprep.subr.mxu0 0.0
    %1251 = vmatpush2.msra.mxu0 0.0
    %1252 = vmatprep.subr.mxu0 0.0
    %1253 = vmatpush2.msra.mxu0 0.0
    %1254 = vmatprep.subr.mxu0 0.0
    %1255 = vmatpush2.msra.mxu0 0.0
    %1256 = vmatprep.subr.mxu0 0.0
    %1257 = vmatpush2.msra.mxu0 0.0
    %1258 = vmatprep.subr.mxu0 0.0
    %1259 = vmatpush2.msra.mxu0 0.0
    %1260 = vmatprep.subr.mxu0 0.0
    %1261 = vmatpush2.msra.mxu0 0.0
    %1262 = vmatprep.subr.mxu0 0.0
    %1263 = vmatpush2.msra.mxu0 0.0
    %1264 = vmatprep.subr.mxu0 0.0
    %1265 = vmatpush2.msra.mxu0 0.0
    %1266 = vmatprep.subr.mxu0 0.0
    %1267 = vmatpush2.msra.mxu0 0.0
    %1268 = vmatprep.subr.mxu0 0.0
    %1269 = vmatpush2.msra.mxu0 0.0
    %1270 = vmatprep.subr.mxu0 0.0
    %1271 = vmatpush2.msra.mxu0 0.0
    %1272 = vmatprep.subr.mxu0 0.0
    %1273 = vmatpush2.msra.mxu0 0.0
    %1274 = vmatprep.subr.mxu0 0.0
    %1275 = vmatpush2.msra.mxu0 0.0
    %1276 = vmatprep.mubr.f32.mxu0 0.0
    %1277 = vmatmul.mubr.f32.gmra.mxu0 %v1210
    %v1278 = vpop.f32.mrf.mxu0
    %v1279 = vadd.f32 0.0, %v1278
    %v1280 = vpop.f32.mrf.mxu0
    %1281 = vdwg.mxu0
    %v1282 = vadd.f32 %v1193, %v1279
    %v1284 = vlaneseq
    %v1285 = vshrl.u32 %v1284, 7
    %v1286 = vsub.s32 0, %v1285
    %v1287 = vrot.slane %v963, %v1286
    %v1289 = vadd.f32 %v1282, %v1287
    %1290 = vst [vmem:[#allocation2] sm:$0xff] %v1289
    // Predicated region
    $region34: #{tpu_custom_call.1} parent=1 // pred_check
      _
    $region35: #{tpu_custom_call.1} parent=1 // pred_check_branch
      %1292 = sbr.rel (0) target = $region37
    $region36: #{tpu_custom_call.1} parent=1 // pred_region
      %s1294 = ssub.s32 128, 128
      %1295 = vsyncadd [#allocation3], %s1294
      %s1297 = sshll.u32 [#allocation2], 4
      %s1298 = int_to_ptr.vmem [resolvable:$true] %s1297
      %1300 = dma.vmem_to_hbm [thread:$0]  %s1298, 128, %s8, [#allocation3]
    $region37: #{tpu_custom_call.1} parent=1 // pred_fallthru
      _
    // Predicated region
    $region38: #{tpu_custom_call.1} parent=1 // pred_check
      _
    $region39: #{tpu_custom_call.1} parent=1 // pred_check_branch
      %1302 = sbr.rel (0) target = $region41
    $region40: #{tpu_custom_call.1} parent=1 // pred_region
      %1303 = dma.done [#allocation3], 128
    $region41: #{tpu_custom_call.1} parent=1 // pred_fallthru
      _
    %1304 = vsyncpa [#allocation3], 1

</llo_original>
